<compile_context>
chip_gen: v5e
topology: v5e:2x2
jax: 0.10.0
libtpu: 0.0.40
codegen_flags: <defaults>
</compile_context>

<pallas_src>
import functools
import numpy as np
import jax
import jax.numpy as jnp
from jax import lax
from jax.experimental import pallas as pl
from jax.experimental.pallas import tpu as pltpu

LANE = 128


def _round_up(x, m):
    return ((x + m - 1) // m) * m


# ----------------------------- in-kernel helpers -----------------------------

def _layer_norm(x, gamma, beta, d_real, eps=1e-6):
    """PyTorch nn.LayerNorm (biased variance, eps=1e-6 as in the reference repo).

    Statistics are over the first `d_real` columns only.  Padded columns hold
    exact zeros by construction (zero-padded weights / biases / gamma / beta),
    so only the variance term needs an explicit mask.
    """
    d_pad = x.shape[-1]
    inv_d = 1.0 / d_real
    mean = jnp.sum(x, axis=-1, keepdims=True) * inv_d
    xc = x - mean
    if d_real != d_pad:
        mask = (lax.broadcasted_iota(jnp.int32, (1, d_pad), 1) < d_real).astype(x.dtype)
        xc = xc * mask
    var = jnp.sum(xc * xc, axis=-1, keepdims=True) * inv_d
    return xc * lax.rsqrt(var + eps) * gamma + beta


# -------------------------- fused encoder kernel ------------------------------
# grid = (B//Bb, n_layers); the activation lives in the output block (whose
# index map ignores the layer axis, so it stays in VMEM across layers);
# per-layer weights are selected by the layer grid index.

def _encoder_kernel(n_head, d_k, d_v, seq_len, d_real,
                    x_ref, ln0_g_ref, ln0_b_ref,
                    wqkv_ref, wo_ref, ln1_g_ref, ln1_b_ref,
                    w1_ref, b1_ref, w2_ref, b2_ref,
                    ln2_g_ref, ln2_b_ref,
                    out_ref):
    f32, bf16 = jnp.float32, jnp.bfloat16
    layer = pl.program_id(1)

    H, dk, dv, S = n_head, d_k, d_v, seq_len
    Hdk, Hdv = H * dk, H * dv
    M = out_ref.shape[0]                  # Bb * S token rows in this batch block
    Bb = M // S
    G = H * Bb                            # batched attention groups (head, seq)

    @pl.when(layer == 0)
    def _():
        # "prep" folded into the fused kernel: LayerNorm(embedding + pos_enc).
        # TODO(synk): nn.Dropout(p=0.1) is identity at inference; not applied.
        out_ref[...] = _layer_norm(x_ref[...], ln0_g_ref[...], ln0_b_ref[...], d_real)

    # Layer-resident activation: read-modify-write the output block per layer.
    x = out_ref[...]                                            # (M, Dp) f32
    x_b = x.astype(bf16)

    # --- fused Q/K/V projection: one lane-dense matmul (1/sqrt(dk) folded) ---
    qkv = jnp.dot(x_b, wqkv_ref[0], preferred_element_type=f32).astype(bf16)

    def split_heads(base, hd):
        # (M, H*hd) -> (H, M, hd) -> (H*Bb, S, hd); lane slices + leading-dim
        # stack/reshape only (no lane regrouping of the activation).
        th = jnp.stack(
            [qkv[:, base + h * hd: base + (h + 1) * hd] for h in range(H)], axis=0)
        return th.reshape(G, S, hd)

    q = split_heads(0, dk)                                      # (G, S, dk)
    k = split_heads(Hdk, dk)                                    # (G, S, dk)
    v = split_heads(2 * Hdk, dv)                                # (G, S, dv)

    # --- scaled dot-product attention (full softmax; S is small here) --------
    s = jnp.einsum('gqd,gkd->gqk', q, k, preferred_element_type=f32)
    # TODO(synk): no slf_attn_mask (the reference Encoder.forward passes none);
    # padded batches would need masking here.  For long S, switch to a
    # seq-tiled online-softmax to bound the (G,S,S) f32 scores in VMEM
    # (matters at roughly half the S on v7x's 64 MiB vs v6e's 128 MiB).
    s = s - jnp.max(s, axis=-1, keepdims=True)
    p = jnp.exp(s)
    p = p * pl.reciprocal(jnp.sum(p, axis=-1, keepdims=True), approx=True)
    a = jnp.einsum('gqk,gkd->gqd', p.astype(bf16), v,
                   preferred_element_type=f32).astype(bf16)     # (G, S, dv)

    # --- merge heads on the lane axis + single output projection -------------
    a_cat = jnp.concatenate(
        [a[h * Bb:(h + 1) * Bb].reshape(M, dv) for h in range(H)], axis=-1)
    o = jnp.dot(a_cat, wo_ref[0], preferred_element_type=f32) + x      # residual
    o = _layer_norm(o, ln1_g_ref[0], ln1_b_ref[0], d_real)

    # --- position-wise feed-forward -------------------------------------------
    h1 = jnp.dot(o.astype(bf16), w1_ref[0], preferred_element_type=f32) + b1_ref[0]
    h1 = jnp.maximum(h1, 0.0)                                   # ReLU
    h2 = jnp.dot(h1.astype(bf16), w2_ref[0], preferred_element_type=f32) + b2_ref[0]
    y = _layer_norm(h2 + o, ln2_g_ref[0], ln2_b_ref[0], d_real)

    out_ref[...] = y


# ------------------------------- host wrappers --------------------------------

def _choose_block_batch(batch, seq_len, target_rows=256):
    # Largest divisor of `batch` whose row count (bb*S) stays near the MXU-
    # filling target; keep the sublane dim a multiple of 8 unless taking the
    # whole batch.  (On multi-TC parts one may prefer >=2 batch blocks.)
    cands = [bb for bb in range(1, batch + 1)
             if batch % bb == 0 and ((bb * seq_len) % 8 == 0 or bb == batch)]
    small = [bb for bb in cands if bb * seq_len <= target_rows]
    return max(small) if small else min(cands)


def _vmem_estimate(Mb, D_pad, di_pad, n_head, d_k, d_v, S):
    f4, b2 = 4, 2
    Hdk, Hdv = n_head * d_k, n_head * d_v
    Nqkv = 2 * Hdk + Hdv
    G = (Mb // S) * n_head
    w = (D_pad * Nqkv + Hdv * D_pad + 2 * D_pad * di_pad) * b2 \
        + (6 * D_pad + 2 * di_pad) * f4
    acts = 3 * Mb * D_pad * f4                      # input block (x2) + resident out
    inter = (Mb * Nqkv * (f4 + b2) + 3 * G * S * max(d_k, d_v) * b2
             + 2 * G * S * S * f4 + G * S * d_v * (f4 + b2)
             + Mb * Hdv * b2 + Mb * di_pad * (f4 + b2) + 6 * Mb * D_pad * f4)
    return 2 * w + acts + inter                     # weights double-buffered


def _vmem_limit_bytes(est_bytes):
    # Generation-aware clamp: ~70% of physical VMEM (64 MiB on v7x, 128 MiB on
    # v5e/v6e), falling back to a safe 64 MiB assumption if the query fails.
    cap = 64 * 2 ** 20
    try:
        cap = int(pltpu.get_tpu_info().vmem_capacity_bytes)
    except Exception:
        pass
    return int(min(max(2 * est_bytes, 16 * 2 ** 20), int(0.70 * cap)))


def encoder_forward(packed, src_seq, *, n_head, d_k, d_v, d_model,
                    scale_emb=False, block_batch=None):
    # src_seq: (B, S) int32 token ids
    B, S = src_seq.shape
    D_pad = int(packed["ln0_g"].shape[-1])
    L = int(packed["wqkv"].shape[0])
    di_pad = int(packed["w1"].shape[-1])
    Hdk, Hdv = n_head * d_k, n_head * d_v
    Nqkv = 2 * Hdk + Hdv

    # Embedding lookup (data-dependent gather) + pos-enc add stay in plain-JAX glue.
    # TODO(synk): could fold the gather in-kernel with PrefetchScalarGridSpec +
    # pl.Element row specs to avoid materializing x0 in HBM (marginal at small D).
    emb = jnp.take(packed["emb_table"], src_seq, axis=0).astype(jnp.float32)
    if scale_emb:
        emb = emb * (d_model ** 0.5)
    x0 = (emb + packed["pos_table"][:S][None, :, :]).reshape(B * S, D_pad)

    Bb = block_batch if block_batch is not None else _choose_block_batch(B, S)
    assert B % Bb == 0
    Mb = Bb * S

    kern = functools.partial(_encoder_kernel, n_head, d_k, d_v, S, d_model)

    def layer_spec(arr):
        # NOTE: pipeline depth (pl.Buffered) left at the default of 2; worth a
        # sweep on bandwidth-limited parts when per-layer compute is short.
        n = arr.ndim
        return pl.BlockSpec((1,) + tuple(arr.shape[1:]),
                            lambda b, l, _n=n: (l,) + (0,) * (_n - 1))

    weight_names = ("wqkv", "wo", "ln1_g", "ln1_b",
                    "w1", "b1", "w2", "b2", "ln2_g", "ln2_b")
    weight_args = tuple(packed[nme] for nme in weight_names)
    weight_bytes = sum(int(np.prod(w.shape)) * w.dtype.itemsize for w in weight_args)

    # Advisory cost hint for XLA's scheduler around the fused custom call.
    flops = 2 * B * S * L * (D_pad * Nqkv + Hdk * S + Hdv * S
                             + Hdv * D_pad + 2 * D_pad * di_pad)
    cost = pl.CostEstimate(
        flops=int(flops),
        transcendentals=int(B * L * n_head * S * S),
        bytes_accessed=int(2 * B * S * D_pad * 4 + (B // Bb) * weight_bytes))

    out = pl.pallas_call(
        kern,
        out_shape=jax.ShapeDtypeStruct((B * S, D_pad), jnp.float32),
        grid=(B // Bb, L),
        in_specs=[pl.BlockSpec((Mb, D_pad), lambda b, l: (b, 0)),     # activation
                  pl.BlockSpec((1, D_pad), lambda b, l: (0, 0)),      # ln0 gamma
                  pl.BlockSpec((1, D_pad), lambda b, l: (0, 0))]      # ln0 beta
                 + [layer_spec(w) for w in weight_args],
        out_specs=pl.BlockSpec((Mb, D_pad), lambda b, l: (b, 0)),
        compiler_params=pltpu.CompilerParams(
            dimension_semantics=("parallel", "arbitrary"),
            vmem_limit_bytes=_vmem_limit_bytes(
                _vmem_estimate(Mb, D_pad, di_pad, n_head, d_k, d_v, S))),
        cost_estimate=cost,
    )(x0, packed["ln0_g"], packed["ln0_b"], *weight_args)

    return out.reshape(B, S, D_pad)[:, :, :d_model]


def sinusoid_table(n_position, d_hid):
    # Exact replica of the PyTorch reference PositionalEncoding table.
    def angle_vec(pos):
        return [pos / np.power(10000, 2 * (j // 2) / d_hid) for j in range(d_hid)]
    tbl = np.array([angle_vec(p) for p in range(n_position)])
    tbl[:, 0::2] = np.sin(tbl[:, 0::2])
    tbl[:, 1::2] = np.cos(tbl[:, 1::2])
    return jnp.asarray(tbl, dtype=jnp.float32)        # (n_position, d_hid)


def init_encoder_params(key, n_src_vocab, d_word_vec, n_layers, n_head,
                        d_k, d_v, d_model, d_inner, n_position):
    # PyTorch-layout (out_features, in_features) parameters, as in the reference.
    keys = jax.random.split(key, 2 + 6 * n_layers)
    scale = 0.02
    params = {
        "emb_table": scale * jax.random.normal(
            keys[0], (n_src_vocab, d_word_vec), jnp.float32),
        "pos_table": sinusoid_table(n_position, d_word_vec),
        "ln0_g": jnp.ones((1, d_model), jnp.float32),
        "ln0_b": jnp.zeros((1, d_model), jnp.float32),
        "layers": [],
    }
    for l in range(n_layers):
        k = jax.random.split(keys[2 + l], 6)
        params["layers"].append({
            "wq": scale * jax.random.normal(k[0], (n_head * d_k, d_model), jnp.float32),
            "wk": scale * jax.random.normal(k[1], (n_head * d_k, d_model), jnp.float32),
            "wv": scale * jax.random.normal(k[2], (n_head * d_v, d_model), jnp.float32),
            "wfc": scale * jax.random.normal(k[3], (d_model, n_head * d_v), jnp.float32),
            "ln1_g": jnp.ones((1, d_model), jnp.float32),
            "ln1_b": jnp.zeros((1, d_model), jnp.float32),
            "w1": scale * jax.random.normal(k[4], (d_inner, d_model), jnp.float32),
            "b1": jnp.zeros((1, d_inner), jnp.float32),
            "w2": scale * jax.random.normal(k[5], (d_model, d_inner), jnp.float32),
            "b2": jnp.zeros((1, d_model), jnp.float32),
            "ln2_g": jnp.ones((1, d_model), jnp.float32),
            "ln2_b": jnp.zeros((1, d_model), jnp.float32),
        })
    return params


def pack_encoder_params(params, n_head, d_k, d_v, lane=LANE):
    """Host-side one-time repack:
       * Linear weights pre-transposed to (in, out); Q/K/V fused into one wqkv
         with 1/sqrt(d_k) folded into the Q columns; layers stacked; MXU
         operands cast to bf16 (biases / LN params stay f32).
       * Feature (lane) dims D and d_inner zero-padded to multiples of 128 so
         the big matmuls and all VPU ops are lane-dense; LN gamma/beta are
         zero-padded so padded columns stay exactly zero through the network.
    """
    f32, bf16 = jnp.float32, jnp.bfloat16
    layers = params["layers"]
    D = int(params["ln0_g"].shape[-1])
    d_inner = int(layers[0]["w1"].shape[0])
    D_pad = _round_up(D, lane)
    di_pad = _round_up(d_inner, lane)
    Hdk, Hdv = n_head * d_k, n_head * d_v

    def pad_last(a, new):
        return jnp.pad(a, [(0, 0)] * (a.ndim - 1) + [(0, new - a.shape[-1])])

    def pad2(a, rows, cols):
        return jnp.pad(a, [(0, rows - a.shape[0]), (0, cols - a.shape[1])])

    q_scale = 1.0 / (d_k ** 0.5)

    def wqkv_of(lp):
        wq_t = lp["wq"].T * q_scale                  # (D, Hdk), scale folded into Q
        wk_t = lp["wk"].T                            # (D, Hdk)
        wv_t = lp["wv"].T                            # (D, Hdv)
        m = jnp.concatenate([wq_t, wk_t, wv_t], axis=1)   # (D, 2Hdk+Hdv)
        return pad2(m, D_pad, m.shape[1])

    def stack(fn, dtype=f32):
        return jnp.stack([fn(lp) for lp in layers], axis=0).astype(dtype)

    return {
        "emb_table": pad_last(params["emb_table"], D_pad).astype(f32),
        "pos_table": pad_last(params["pos_table"], D_pad).astype(f32),
        "ln0_g": pad_last(params["ln0_g"], D_pad),
        "ln0_b": pad_last(params["ln0_b"], D_pad),
        "wqkv": stack(wqkv_of, bf16),                                   # (L, Dp, Nqkv)
        "wo": stack(lambda lp: pad2(lp["wfc"].T, Hdv, D_pad), bf16),    # (L, Hdv, Dp)
        "ln1_g": stack(lambda lp: pad_last(lp["ln1_g"], D_pad)),
        "ln1_b": stack(lambda lp: pad_last(lp["ln1_b"], D_pad)),
        "w1": stack(lambda lp: pad2(lp["w1"].T, D_pad, di_pad), bf16),  # (L, Dp, dip)
        "b1": stack(lambda lp: pad_last(lp["b1"], di_pad)),             # (L, 1, dip)
        "w2": stack(lambda lp: pad2(lp["w2"].T, di_pad, D_pad), bf16),  # (L, dip, Dp)
        "b2": stack(lambda lp: pad_last(lp["b2"], D_pad)),              # (L, 1, Dp)
        "ln2_g": stack(lambda lp: pad_last(lp["ln2_g"], D_pad)),
        "ln2_b": stack(lambda lp: pad_last(lp["ln2_b"], D_pad)),
    }


# ----------------------------------- main -------------------------------------

if __name__ == "__main__":
    # small but representative config
    n_src_vocab, d_model, d_inner = 50, 32, 64
    n_layers, n_head, d_k, d_v = 2, 2, 8, 8
    n_position = 200
    B, S = 2, 8

    key = jax.random.PRNGKey(0)
    pkey, dkey = jax.random.split(key)
    params = init_encoder_params(pkey, n_src_vocab, d_model, n_layers, n_head,
                                 d_k, d_v, d_model, d_inner, n_position)
    packed = pack_encoder_params(params, n_head, d_k, d_v)
    src_seq = jax.random.randint(dkey, (B, S), 0, n_src_vocab, dtype=jnp.int32)

    out = encoder_forward(packed, src_seq, n_head=n_head, d_k=d_k, d_v=d_v,
                          d_model=d_model, scale_emb=False)
    out = jax.block_until_ready(out)
    assert out.shape == (B, S, d_model) and out.dtype == jnp.float32
    assert bool(jnp.all(jnp.isfinite(out)))
    print("KERNEL_OK")
</pallas_src>

<mosaic_0001>
module attributes {stable_mosaic.version = 11 : i64} {
  func.func @_encoder_kernel(%arg0: i32, %arg1: i32, %arg2: memref<16x128xf32, #tpu.memory_space<vmem>>, %arg3: memref<1x128xf32, #tpu.memory_space<vmem>>, %arg4: memref<1x128xf32, #tpu.memory_space<vmem>>, %arg5: memref<1x128x48xbf16, #tpu.memory_space<vmem>>, %arg6: memref<1x16x128xbf16, #tpu.memory_space<vmem>>, %arg7: memref<1x1x128xf32, #tpu.memory_space<vmem>>, %arg8: memref<1x1x128xf32, #tpu.memory_space<vmem>>, %arg9: memref<1x128x128xbf16, #tpu.memory_space<vmem>>, %arg10: memref<1x1x128xf32, #tpu.memory_space<vmem>>, %arg11: memref<1x128x128xbf16, #tpu.memory_space<vmem>>, %arg12: memref<1x1x128xf32, #tpu.memory_space<vmem>>, %arg13: memref<1x1x128xf32, #tpu.memory_space<vmem>>, %arg14: memref<1x1x128xf32, #tpu.memory_space<vmem>>, %arg15: memref<16x128xf32, #tpu.memory_space<vmem>>) attributes {dimension_semantics = [#tpu.dimension_semantics<parallel>, #tpu.dimension_semantics<arbitrary>], iteration_bounds = array<i64: 1, 2>, scalar_prefetch = 0 : i64, scratch_operands = 0 : i64, tpu.core_type = #tpu.core_type<tc>, window_params = [{transform_indices = @transform_0, window_bounds = array<i64: 16, 128>}, {pipeline_mode = #tpu.pipeline_mode<synchronous>, transform_indices = @transform_1, window_bounds = array<i64: 1, 128>}, {pipeline_mode = #tpu.pipeline_mode<synchronous>, transform_indices = @transform_2, window_bounds = array<i64: 1, 128>}, {transform_indices = @transform_3, window_bounds = array<i64: 1, 128, 48>}, {transform_indices = @transform_4, window_bounds = array<i64: 1, 16, 128>}, {transform_indices = @transform_5, window_bounds = array<i64: 1, 1, 128>}, {transform_indices = @transform_6, window_bounds = array<i64: 1, 1, 128>}, {transform_indices = @transform_7, window_bounds = array<i64: 1, 128, 128>}, {transform_indices = @transform_8, window_bounds = array<i64: 1, 1, 128>}, {transform_indices = @transform_9, window_bounds = array<i64: 1, 128, 128>}, {transform_indices = @transform_10, window_bounds = array<i64: 1, 1, 128>}, {transform_indices = @transform_11, window_bounds = array<i64: 1, 1, 128>}, {transform_indices = @transform_12, window_bounds = array<i64: 1, 1, 128>}, {transform_indices = @transform_13, window_bounds = array<i64: 16, 128>}]} {
    %c0_i32 = arith.constant 0 : i32
    %0 = arith.cmpi eq, %arg1, %c0_i32 : i32
    %1 = arith.extui %0 : i1 to i32
    %c0_i32_0 = arith.constant 0 : i32
    %2 = arith.cmpi ne, %1, %c0_i32_0 : i32
    scf.if %2 {
      %c0_53 = arith.constant 0 : index
      %c0_54 = arith.constant 0 : index
      %132 = vector.load %arg2[%c0_53, %c0_54] : memref<16x128xf32, #tpu.memory_space<vmem>>, vector<16x128xf32>
      %c0_55 = arith.constant 0 : index
      %c0_56 = arith.constant 0 : index
      %133 = vector.load %arg3[%c0_55, %c0_56] : memref<1x128xf32, #tpu.memory_space<vmem>>, vector<1x128xf32>
      %c0_57 = arith.constant 0 : index
      %c0_58 = arith.constant 0 : index
      %134 = vector.load %arg4[%c0_57, %c0_58] : memref<1x128xf32, #tpu.memory_space<vmem>>, vector<1x128xf32>
      %cst_59 = arith.constant dense<0.000000e+00> : vector<16xf32>
      %135 = vector.multi_reduction <add>, %132, %cst_59 [1] : vector<16x128xf32> to vector<16xf32>
      %136 = vector.shape_cast %135 : vector<16xf32> to vector<16x1xf32>
      %cst_60 = arith.constant 3.125000e-02 : f32
      %137 = vector.broadcast %cst_60 : f32 to vector<16x1xf32>
      %138 = arith.mulf %136, %137 : vector<16x1xf32>
      %139 = vector.broadcast %138 : vector<16x1xf32> to vector<16x128xf32>
      %140 = arith.subf %132, %139 : vector<16x128xf32>
      %141 = tpu.iota {dimensions = array<i32: 1>} : vector<1x128xi32>
      %c32_i32_61 = arith.constant 32 : i32
      %142 = vector.broadcast %c32_i32_61 : i32 to vector<1x128xi32>
      %143 = arith.cmpi slt, %141, %142 : vector<1x128xi32>
      %144 = arith.extui %143 : vector<1x128xi1> to vector<1x128xi32>
      %145 = arith.sitofp %144 : vector<1x128xi32> to vector<1x128xf32>
      %146 = vector.broadcast %145 : vector<1x128xf32> to vector<16x128xf32>
      %147 = arith.mulf %140, %146 : vector<16x128xf32>
      %148 = arith.mulf %147, %147 : vector<16x128xf32>
      %cst_62 = arith.constant dense<0.000000e+00> : vector<16xf32>
      %149 = vector.multi_reduction <add>, %148, %cst_62 [1] : vector<16x128xf32> to vector<16xf32>
      %150 = vector.shape_cast %149 : vector<16xf32> to vector<16x1xf32>
      %cst_63 = arith.constant 3.125000e-02 : f32
      %151 = vector.broadcast %cst_63 : f32 to vector<16x1xf32>
      %152 = arith.mulf %150, %151 : vector<16x1xf32>
      %cst_64 = arith.constant 9.99999997E-7 : f32
      %153 = vector.broadcast %cst_64 : f32 to vector<16x1xf32>
      %154 = arith.addf %152, %153 : vector<16x1xf32>
      %155 = math.rsqrt %154 : vector<16x1xf32>
      %156 = vector.broadcast %155 : vector<16x1xf32> to vector<16x128xf32>
      %157 = arith.mulf %147, %156 : vector<16x128xf32>
      %158 = vector.broadcast %133 : vector<1x128xf32> to vector<16x128xf32>
      %159 = arith.mulf %157, %158 : vector<16x128xf32>
      %160 = vector.broadcast %134 : vector<1x128xf32> to vector<16x128xf32>
      %161 = arith.addf %159, %160 : vector<16x128xf32>
      %c0_65 = arith.constant 0 : index
      %c0_66 = arith.constant 0 : index
      %162 = vector.load %arg15[%c0_65, %c0_66] : memref<16x128xf32, #tpu.memory_space<vmem>>, vector<16x128xf32>
      tpu.vector_store %arg15[%c0_65, %c0_66], %161 {strides = array<i32>} : memref<16x128xf32, #tpu.memory_space<vmem>>, vector<16x128xf32>,
    } else {
    }
    %c0 = arith.constant 0 : index
    %c0_1 = arith.constant 0 : index
    %3 = vector.load %arg15[%c0, %c0_1] : memref<16x128xf32, #tpu.memory_space<vmem>>, vector<16x128xf32>
    %4 = arith.truncf %3 : vector<16x128xf32> to vector<16x128xbf16>
    %c0_2 = arith.constant 0 : index
    %c0_3 = arith.constant 0 : index
    %c0_4 = arith.constant 0 : index
    %5 = vector.load %arg5[%c0_2, %c0_3, %c0_4] : memref<1x128x48xbf16, #tpu.memory_space<vmem>>, vector<1x128x48xbf16>
    %6 = vector.shape_cast %5 : vector<1x128x48xbf16> to vector<128x48xbf16>
    %cst = arith.constant dense<0.000000e+00> : vector<16x48xf32>
    %7 = tpu.matmul %4, %6, %cst {dimension_numbers = #tpu.dot_dimension_numbers<[1], [0], [0], [1], [0, 0, 1, 1], [], []>} : vector<16x128xbf16>, vector<128x48xbf16>, vector<16x48xf32> -> vector<16x48xf32>
    %8 = arith.truncf %7 : vector<16x48xf32> to vector<16x48xbf16>
    %9 = vector.extract_strided_slice %8 {offsets = [0, 0], sizes = [16, 8], strides = [1, 1]} : vector<16x48xbf16> to vector<16x8xbf16>
    %10 = vector.extract_strided_slice %8 {offsets = [0, 8], sizes = [16, 8], strides = [1, 1]} : vector<16x48xbf16> to vector<16x8xbf16>
    %11 = vector.shape_cast %9 : vector<16x8xbf16> to vector<1x16x8xbf16>
    %12 = vector.shape_cast %10 : vector<16x8xbf16> to vector<1x16x8xbf16>
    %13 = tpu.concatenate %11, %12 in 0 : vector<1x16x8xbf16>, vector<1x16x8xbf16> -> vector<2x16x8xbf16>
    %14 = vector.shape_cast %13 : vector<2x16x8xbf16> to vector<4x8x8xbf16>
    %15 = vector.extract_strided_slice %8 {offsets = [0, 16], sizes = [16, 8], strides = [1, 1]} : vector<16x48xbf16> to vector<16x8xbf16>
    %16 = vector.extract_strided_slice %8 {offsets = [0, 24], sizes = [16, 8], strides = [1, 1]} : vector<16x48xbf16> to vector<16x8xbf16>
    %17 = vector.shape_cast %15 : vector<16x8xbf16> to vector<1x16x8xbf16>
    %18 = vector.shape_cast %16 : vector<16x8xbf16> to vector<1x16x8xbf16>
    %19 = tpu.concatenate %17, %18 in 0 : vector<1x16x8xbf16>, vector<1x16x8xbf16> -> vector<2x16x8xbf16>
    %20 = vector.shape_cast %19 : vector<2x16x8xbf16> to vector<4x8x8xbf16>
    %21 = vector.extract_strided_slice %8 {offsets = [0, 32], sizes = [16, 8], strides = [1, 1]} : vector<16x48xbf16> to vector<16x8xbf16>
    %22 = vector.extract_strided_slice %8 {offsets = [0, 40], sizes = [16, 8], strides = [1, 1]} : vector<16x48xbf16> to vector<16x8xbf16>
    %23 = vector.shape_cast %21 : vector<16x8xbf16> to vector<1x16x8xbf16>
    %24 = vector.shape_cast %22 : vector<16x8xbf16> to vector<1x16x8xbf16>
    %25 = tpu.concatenate %23, %24 in 0 : vector<1x16x8xbf16>, vector<1x16x8xbf16> -> vector<2x16x8xbf16>
    %26 = vector.shape_cast %25 : vector<2x16x8xbf16> to vector<4x8x8xbf16>
    "tpu.trace_start"() <{level = 10 : i32, message = "gqd,gkd->gqk"}> : () -> ()
    %cst_5 = arith.constant dense<0.000000e+00> : vector<4x8x8xf32>
    %27 = tpu.matmul %14, %20, %cst_5 {dimension_numbers = #tpu.dot_dimension_numbers<[2], [2], [1], [1], [0, 0, 0, 1, 1, 1], [0], [0]>} : vector<4x8x8xbf16>, vector<4x8x8xbf16>, vector<4x8x8xf32> -> vector<4x8x8xf32>
    "tpu.trace_stop"() : () -> ()
    %cst_6 = arith.constant dense<0xFF800000> : vector<4x8xf32>
    %28 = vector.multi_reduction <maximumf>, %27, %cst_6 [2] : vector<4x8x8xf32> to vector<4x8xf32>
    %29 = vector.shape_cast %28 : vector<4x8xf32> to vector<4x8x1xf32>
    %30 = vector.broadcast %29 : vector<4x8x1xf32> to vector<4x8x8xf32>
    %31 = arith.subf %27, %30 : vector<4x8x8xf32>
    %32 = math.exp %31 : vector<4x8x8xf32>
    %cst_7 = arith.constant dense<0.000000e+00> : vector<4x8xf32>
    %33 = vector.multi_reduction <add>, %32, %cst_7 [2] : vector<4x8x8xf32> to vector<4x8xf32>
    %34 = vector.shape_cast %33 : vector<4x8xf32> to vector<4x8x1xf32>
    %35 = tpu.reciprocal %34 {approx = true} : vector<4x8x1xf32> -> vector<4x8x1xf32>
    %36 = vector.broadcast %35 : vector<4x8x1xf32> to vector<4x8x8xf32>
    %37 = arith.mulf %32, %36 : vector<4x8x8xf32>
    %38 = arith.truncf %37 : vector<4x8x8xf32> to vector<4x8x8xbf16>
    "tpu.trace_start"() <{level = 10 : i32, message = "gqk,gkd->gqd"}> : () -> ()
    %cst_8 = arith.constant dense<0.000000e+00> : vector<4x8x8xf32>
    %39 = tpu.matmul %38, %26, %cst_8 {dimension_numbers = #tpu.dot_dimension_numbers<[2], [1], [1], [2], [0, 0, 0, 1, 1, 2], [0], [0]>} : vector<4x8x8xbf16>, vector<4x8x8xbf16>, vector<4x8x8xf32> -> vector<4x8x8xf32>
    "tpu.trace_stop"() : () -> ()
    %40 = arith.truncf %39 : vector<4x8x8xf32> to vector<4x8x8xbf16>
    %41 = vector.extract_strided_slice %40 {offsets = [0, 0, 0], sizes = [2, 8, 8], strides = [1, 1, 1]} : vector<4x8x8xbf16> to vector<2x8x8xbf16>
    %42 = vector.shape_cast %41 : vector<2x8x8xbf16> to vector<16x8xbf16>
    %43 = vector.extract_strided_slice %40 {offsets = [2, 0, 0], sizes = [2, 8, 8], strides = [1, 1, 1]} : vector<4x8x8xbf16> to vector<2x8x8xbf16>
    %44 = vector.shape_cast %43 : vector<2x8x8xbf16> to vector<16x8xbf16>
    %45 = tpu.concatenate %42, %44 in 1 : vector<16x8xbf16>, vector<16x8xbf16> -> vector<16x16xbf16>
    %c0_9 = arith.constant 0 : index
    %c0_10 = arith.constant 0 : index
    %c0_11 = arith.constant 0 : index
    %46 = vector.load %arg6[%c0_9, %c0_10, %c0_11] : memref<1x16x128xbf16, #tpu.memory_space<vmem>>, vector<1x16x128xbf16>
    %47 = vector.shape_cast %46 : vector<1x16x128xbf16> to vector<16x128xbf16>
    %cst_12 = arith.constant dense<0.000000e+00> : vector<16x128xf32>
    %48 = tpu.matmul %45, %47, %cst_12 {dimension_numbers = #tpu.dot_dimension_numbers<[1], [0], [0], [1], [0, 0, 1, 1], [], []>} : vector<16x16xbf16>, vector<16x128xbf16>, vector<16x128xf32> -> vector<16x128xf32>
    %49 = arith.addf %48, %3 : vector<16x128xf32>
    %c0_13 = arith.constant 0 : index
    %c0_14 = arith.constant 0 : index
    %c0_15 = arith.constant 0 : index
    %50 = vector.load %arg7[%c0_13, %c0_14, %c0_15] : memref<1x1x128xf32, #tpu.memory_space<vmem>>, vector<1x1x128xf32>
    %51 = vector.shape_cast %50 : vector<1x1x128xf32> to vector<1x128xf32>
    %c0_16 = arith.constant 0 : index
    %c0_17 = arith.constant 0 : index
    %c0_18 = arith.constant 0 : index
    %52 = vector.load %arg8[%c0_16, %c0_17, %c0_18] : memref<1x1x128xf32, #tpu.memory_space<vmem>>, vector<1x1x128xf32>
    %53 = vector.shape_cast %52 : vector<1x1x128xf32> to vector<1x128xf32>
    %cst_19 = arith.constant dense<0.000000e+00> : vector<16xf32>
    %54 = vector.multi_reduction <add>, %49, %cst_19 [1] : vector<16x128xf32> to vector<16xf32>
    %55 = vector.shape_cast %54 : vector<16xf32> to vector<16x1xf32>
    %cst_20 = arith.constant 3.125000e-02 : f32
    %56 = vector.broadcast %cst_20 : f32 to vector<16x1xf32>
    %57 = arith.mulf %55, %56 : vector<16x1xf32>
    %58 = vector.broadcast %57 : vector<16x1xf32> to vector<16x128xf32>
    %59 = arith.subf %49, %58 : vector<16x128xf32>
    %60 = tpu.iota {dimensions = array<i32: 1>} : vector<1x128xi32>
    %c32_i32 = arith.constant 32 : i32
    %61 = vector.broadcast %c32_i32 : i32 to vector<1x128xi32>
    %62 = arith.cmpi slt, %60, %61 : vector<1x128xi32>
    %63 = arith.extui %62 : vector<1x128xi1> to vector<1x128xi32>
    %64 = arith.sitofp %63 : vector<1x128xi32> to vector<1x128xf32>
    %65 = vector.broadcast %64 : vector<1x128xf32> to vector<16x128xf32>
    %66 = arith.mulf %59, %65 : vector<16x128xf32>
    %67 = arith.mulf %66, %66 : vector<16x128xf32>
    %cst_21 = arith.constant dense<0.000000e+00> : vector<16xf32>
    %68 = vector.multi_reduction <add>, %67, %cst_21 [1] : vector<16x128xf32> to vector<16xf32>
    %69 = vector.shape_cast %68 : vector<16xf32> to vector<16x1xf32>
    %cst_22 = arith.constant 3.125000e-02 : f32
    %70 = vector.broadcast %cst_22 : f32 to vector<16x1xf32>
    %71 = arith.mulf %69, %70 : vector<16x1xf32>
    %cst_23 = arith.constant 9.99999997E-7 : f32
    %72 = vector.broadcast %cst_23 : f32 to vector<16x1xf32>
    %73 = arith.addf %71, %72 : vector<16x1xf32>
    %74 = math.rsqrt %73 : vector<16x1xf32>
    %75 = vector.broadcast %74 : vector<16x1xf32> to vector<16x128xf32>
    %76 = arith.mulf %66, %75 : vector<16x128xf32>
    %77 = vector.broadcast %51 : vector<1x128xf32> to vector<16x128xf32>
    %78 = arith.mulf %76, %77 : vector<16x128xf32>
    %79 = vector.broadcast %53 : vector<1x128xf32> to vector<16x128xf32>
    %80 = arith.addf %78, %79 : vector<16x128xf32>
    %81 = arith.truncf %80 : vector<16x128xf32> to vector<16x128xbf16>
    %c0_24 = arith.constant 0 : index
    %c0_25 = arith.constant 0 : index
    %c0_26 = arith.constant 0 : index
    %82 = vector.load %arg9[%c0_24, %c0_25, %c0_26] : memref<1x128x128xbf16, #tpu.memory_space<vmem>>, vector<1x128x128xbf16>
    %83 = vector.shape_cast %82 : vector<1x128x128xbf16> to vector<128x128xbf16>
    %cst_27 = arith.constant dense<0.000000e+00> : vector<16x128xf32>
    %84 = tpu.matmul %81, %83, %cst_27 {dimension_numbers = #tpu.dot_dimension_numbers<[1], [0], [0], [1], [0, 0, 1, 1], [], []>} : vector<16x128xbf16>, vector<128x128xbf16>, vector<16x128xf32> -> vector<16x128xf32>
    %c0_28 = arith.constant 0 : index
    %c0_29 = arith.constant 0 : index
    %c0_30 = arith.constant 0 : index
    %85 = vector.load %arg10[%c0_28, %c0_29, %c0_30] : memref<1x1x128xf32, #tpu.memory_space<vmem>>, vector<1x1x128xf32>
    %86 = vector.shape_cast %85 : vector<1x1x128xf32> to vector<1x128xf32>
    %87 = vector.broadcast %86 : vector<1x128xf32> to vector<16x128xf32>
    %88 = arith.addf %84, %87 : vector<16x128xf32>
    %cst_31 = arith.constant 0.000000e+00 : f32
    %89 = vector.broadcast %cst_31 : f32 to vector<16x128xf32>
    %90 = arith.maximumf %88, %89 : vector<16x128xf32>
    %91 = arith.truncf %90 : vector<16x128xf32> to vector<16x128xbf16>
    %c0_32 = arith.constant 0 : index
    %c0_33 = arith.constant 0 : index
    %c0_34 = arith.constant 0 : index
    %92 = vector.load %arg11[%c0_32, %c0_33, %c0_34] : memref<1x128x128xbf16, #tpu.memory_space<vmem>>, vector<1x128x128xbf16>
    %93 = vector.shape_cast %92 : vector<1x128x128xbf16> to vector<128x128xbf16>
    %cst_35 = arith.constant dense<0.000000e+00> : vector<16x128xf32>
    %94 = tpu.matmul %91, %93, %cst_35 {dimension_numbers = #tpu.dot_dimension_numbers<[1], [0], [0], [1], [0, 0, 1, 1], [], []>} : vector<16x128xbf16>, vector<128x128xbf16>, vector<16x128xf32> -> vector<16x128xf32>
    %c0_36 = arith.constant 0 : index
    %c0_37 = arith.constant 0 : index
    %c0_38 = arith.constant 0 : index
    %95 = vector.load %arg12[%c0_36, %c0_37, %c0_38] : memref<1x1x128xf32, #tpu.memory_space<vmem>>, vector<1x1x128xf32>
    %96 = vector.shape_cast %95 : vector<1x1x128xf32> to vector<1x128xf32>
    %97 = vector.broadcast %96 : vector<1x128xf32> to vector<16x128xf32>
    %98 = arith.addf %94, %97 : vector<16x128xf32>
    %99 = arith.addf %98, %80 : vector<16x128xf32>
    %c0_39 = arith.constant 0 : index
    %c0_40 = arith.constant 0 : index
    %c0_41 = arith.constant 0 : index
    %100 = vector.load %arg13[%c0_39, %c0_40, %c0_41] : memref<1x1x128xf32, #tpu.memory_space<vmem>>, vector<1x1x128xf32>
    %101 = vector.shape_cast %100 : vector<1x1x128xf32> to vector<1x128xf32>
    %c0_42 = arith.constant 0 : index
    %c0_43 = arith.constant 0 : index
    %c0_44 = arith.constant 0 : index
    %102 = vector.load %arg14[%c0_42, %c0_43, %c0_44] : memref<1x1x128xf32, #tpu.memory_space<vmem>>, vector<1x1x128xf32>
    %103 = vector.shape_cast %102 : vector<1x1x128xf32> to vector<1x128xf32>
    %cst_45 = arith.constant dense<0.000000e+00> : vector<16xf32>
    %104 = vector.multi_reduction <add>, %99, %cst_45 [1] : vector<16x128xf32> to vector<16xf32>
    %105 = vector.shape_cast %104 : vector<16xf32> to vector<16x1xf32>
    %cst_46 = arith.constant 3.125000e-02 : f32
    %106 = vector.broadcast %cst_46 : f32 to vector<16x1xf32>
    %107 = arith.mulf %105, %106 : vector<16x1xf32>
    %108 = vector.broadcast %107 : vector<16x1xf32> to vector<16x128xf32>
    %109 = arith.subf %99, %108 : vector<16x128xf32>
    %110 = tpu.iota {dimensions = array<i32: 1>} : vector<1x128xi32>
    %c32_i32_47 = arith.constant 32 : i32
    %111 = vector.broadcast %c32_i32_47 : i32 to vector<1x128xi32>
    %112 = arith.cmpi slt, %110, %111 : vector<1x128xi32>
    %113 = arith.extui %112 : vector<1x128xi1> to vector<1x128xi32>
    %114 = arith.sitofp %113 : vector<1x128xi32> to vector<1x128xf32>
    %115 = vector.broadcast %114 : vector<1x128xf32> to vector<16x128xf32>
    %116 = arith.mulf %109, %115 : vector<16x128xf32>
    %117 = arith.mulf %116, %116 : vector<16x128xf32>
    %cst_48 = arith.constant dense<0.000000e+00> : vector<16xf32>
    %118 = vector.multi_reduction <add>, %117, %cst_48 [1] : vector<16x128xf32> to vector<16xf32>
    %119 = vector.shape_cast %118 : vector<16xf32> to vector<16x1xf32>
    %cst_49 = arith.constant 3.125000e-02 : f32
    %120 = vector.broadcast %cst_49 : f32 to vector<16x1xf32>
    %121 = arith.mulf %119, %120 : vector<16x1xf32>
    %cst_50 = arith.constant 9.99999997E-7 : f32
    %122 = vector.broadcast %cst_50 : f32 to vector<16x1xf32>
    %123 = arith.addf %121, %122 : vector<16x1xf32>
    %124 = math.rsqrt %123 : vector<16x1xf32>
    %125 = vector.broadcast %124 : vector<16x1xf32> to vector<16x128xf32>
    %126 = arith.mulf %116, %125 : vector<16x128xf32>
    %127 = vector.broadcast %101 : vector<1x128xf32> to vector<16x128xf32>
    %128 = arith.mulf %126, %127 : vector<16x128xf32>
    %129 = vector.broadcast %103 : vector<1x128xf32> to vector<16x128xf32>
    %130 = arith.addf %128, %129 : vector<16x128xf32>
    %c0_51 = arith.constant 0 : index
    %c0_52 = arith.constant 0 : index
    %131 = vector.load %arg15[%c0_51, %c0_52] : memref<16x128xf32, #tpu.memory_space<vmem>>, vector<16x128xf32>
    tpu.vector_store %arg15[%c0_51, %c0_52], %130 {strides = array<i32>} : memref<16x128xf32, #tpu.memory_space<vmem>>, vector<16x128xf32>,
    return
  }
  func.func @transform_0(%arg0: i32, %arg1: i32) -> (i32, i32) {
    %c0_i32 = arith.constant 0 : i32
    %c0_i32_0 = arith.constant 0 : i32
    return %arg0, %c0_i32 : i32, i32
  }
  func.func @transform_1(%arg0: i32, %arg1: i32) -> (i32, i32) {
    %c0_i32 = arith.constant 0 : i32
    %c0_i32_0 = arith.constant 0 : i32
    %c0_i32_1 = arith.constant 0 : i32
    return %c0_i32, %c0_i32_0 : i32, i32
  }
  func.func @transform_2(%arg0: i32, %arg1: i32) -> (i32, i32) {
    %c0_i32 = arith.constant 0 : i32
    %c0_i32_0 = arith.constant 0 : i32
    %c0_i32_1 = arith.constant 0 : i32
    return %c0_i32, %c0_i32_0 : i32, i32
  }
  func.func @transform_3(%arg0: i32, %arg1: i32) -> (i32, i32, i32) {
    %c0_i32 = arith.constant 0 : i32
    %c0_i32_0 = arith.constant 0 : i32
    %c0_i32_1 = arith.constant 0 : i32
    return %arg1, %c0_i32, %c0_i32_0 : i32, i32, i32
  }
  func.func @transform_4(%arg0: i32, %arg1: i32) -> (i32, i32, i32) {
    %c0_i32 = arith.constant 0 : i32
    %c0_i32_0 = arith.constant 0 : i32
    %c0_i32_1 = arith.constant 0 : i32
    return %arg1, %c0_i32, %c0_i32_0 : i32, i32, i32
  }
  func.func @transform_5(%arg0: i32, %arg1: i32) -> (i32, i32, i32) {
    %c0_i32 = arith.constant 0 : i32
    %c0_i32_0 = arith.constant 0 : i32
    %c0_i32_1 = arith.constant 0 : i32
    return %arg1, %c0_i32, %c0_i32_0 : i32, i32, i32
  }
  func.func @transform_6(%arg0: i32, %arg1: i32) -> (i32, i32, i32) {
    %c0_i32 = arith.constant 0 : i32
    %c0_i32_0 = arith.constant 0 : i32
    %c0_i32_1 = arith.constant 0 : i32
    return %arg1, %c0_i32, %c0_i32_0 : i32, i32, i32
  }
  func.func @transform_7(%arg0: i32, %arg1: i32) -> (i32, i32, i32) {
    %c0_i32 = arith.constant 0 : i32
    %c0_i32_0 = arith.constant 0 : i32
    %c0_i32_1 = arith.constant 0 : i32
    return %arg1, %c0_i32, %c0_i32_0 : i32, i32, i32
  }
  func.func @transform_8(%arg0: i32, %arg1: i32) -> (i32, i32, i32) {
    %c0_i32 = arith.constant 0 : i32
    %c0_i32_0 = arith.constant 0 : i32
    %c0_i32_1 = arith.constant 0 : i32
    return %arg1, %c0_i32, %c0_i32_0 : i32, i32, i32
  }
  func.func @transform_9(%arg0: i32, %arg1: i32) -> (i32, i32, i32) {
    %c0_i32 = arith.constant 0 : i32
    %c0_i32_0 = arith.constant 0 : i32
    %c0_i32_1 = arith.constant 0 : i32
    return %arg1, %c0_i32, %c0_i32_0 : i32, i32, i32
  }
  func.func @transform_10(%arg0: i32, %arg1: i32) -> (i32, i32, i32) {
    %c0_i32 = arith.constant 0 : i32
    %c0_i32_0 = arith.constant 0 : i32
    %c0_i32_1 = arith.constant 0 : i32
    return %arg1, %c0_i32, %c0_i32_0 : i32, i32, i32
  }
  func.func @transform_11(%arg0: i32, %arg1: i32) -> (i32, i32, i32) {
    %c0_i32 = arith.constant 0 : i32
    %c0_i32_0 = arith.constant 0 : i32
    %c0_i32_1 = arith.constant 0 : i32
    return %arg1, %c0_i32, %c0_i32_0 : i32, i32, i32
  }
  func.func @transform_12(%arg0: i32, %arg1: i32) -> (i32, i32, i32) {
    %c0_i32 = arith.constant 0 : i32
    %c0_i32_0 = arith.constant 0 : i32
    %c0_i32_1 = arith.constant 0 : i32
    return %arg1, %c0_i32, %c0_i32_0 : i32, i32, i32
  }
  func.func @transform_13(%arg0: i32, %arg1: i32) -> (i32, i32) {
    %c0_i32 = arith.constant 0 : i32
    %c0_i32_0 = arith.constant 0 : i32
    return %arg0, %c0_i32 : i32, i32
  }
}

</mosaic_0001>

<llo_original>
// kernel: tpu_custom_call.1
$region0: #{tpu_custom_call.1}
  #allocation0 [shape = 'u32[]', space=smem, size = 0x4, offset = 0x4, fixed_abs, tag = 'smem constant byte address 0x4 - core index']
  #allocation1 [shape = 'u32[72,128]{1,0:T(1,128)}', space=vmem, size = 0x9000, scoped, tag = 'internal scratch']
  %s0 = inlined_call_operand.vmem [shape: f32[16,128], index: 0, kind: input, shape index: {}]
  %s1 = inlined_call_operand.vmem [shape: f32[1,128], index: 1, kind: input, shape index: {}]
  %s2 = inlined_call_operand.vmem [shape: f32[1,128], index: 2, kind: input, shape index: {}]
  %s3 = inlined_call_operand.vmem [shape: bf16[2,128,48], index: 3, kind: input, shape index: {}]
  %s4 = inlined_call_operand.vmem [shape: bf16[2,16,128], index: 4, kind: input, shape index: {}]
  %s5 = inlined_call_operand.vmem [shape: f32[2,1,128], index: 5, kind: input, shape index: {}]
  %s6 = inlined_call_operand.vmem [shape: f32[2,1,128], index: 6, kind: input, shape index: {}]
  %s7 = inlined_call_operand.vmem [shape: bf16[2,128,128], index: 7, kind: input, shape index: {}]
  %s8 = inlined_call_operand.vmem [shape: f32[2,1,128], index: 8, kind: input, shape index: {}]
  %s9 = inlined_call_operand.hbm [shape: bf16[2,128,128], index: 9, kind: input, shape index: {}]
  %s10 = inlined_call_operand.vmem [shape: f32[2,1,128], index: 10, kind: input, shape index: {}]
  %s11 = inlined_call_operand.vmem [shape: f32[2,1,128], index: 11, kind: input, shape index: {}]
  %s12 = inlined_call_operand.vmem [shape: f32[2,1,128], index: 12, kind: input, shape index: {}]
  %s13 = inlined_call_operand.hbm [shape: f32[16,128], index: 13, kind: output, shape index: {}]
  %s14 = sld [smem:[#allocation0]]
  $region93: #{tpu_custom_call.1} parent=0
    _
  %s16 = ssub.s32 1, %s14
  %s17 = scalar_select 0, %s16, %s14
  $region1: #{tpu_custom_call.1} parent=0
    #allocation2 [shape = 'u8[65536]{0}', space=vmem, size = 0x10000, scoped, tag = 'input window, operand 9']
    #allocation3 [shape = 's32[2]{0}', space=sflag, size = 0x8, scoped, tag = 'scoped memory for tpu_custom_call.1']
    #allocation4 [shape = 's32[2]{0}', space=sflag, size = 0x8, scoped, tag = 'scoped memory for tpu_custom_call.1']
    #allocation5 [shape = 'u8[8192]{0}', space=vmem, size = 0x2000, scoped, tag = 'output window, operand 0, single buffered']
    %18 = vsyncpa [#allocation3], 0
    %s19 = scalar_lea.sflag [#allocation3], 1
    %20 = vsyncpa %s19, 0
    %21 = vsyncpa [#allocation4], 0
    loop: start=0, step=1, limit=4
    $region2: #{tpu_custom_call.1} parent=1 // loop_pre_header
      _
    $region3: #{tpu_custom_call.1} parent=1 // loop_header
      %s23 = sphi 0, %s27
      %p24 = scmp.ge.s32.totalorder %s23, 4
      %s30 = sphi 0, %s42
      %s31 = sphi 0, %s38
      %s32 = sphi 0, %s30
      %s33 = sphi 0, %s31
      %s34 = sphi 0, %s32
      %s35 = sphi 0, %s33
      %s45 = sphi 0, %s47
      %s48 = sphi 0, %s45
      %s49 = sphi 0, %s48
      %s65 = sphi 0, %s49
      %s69 = sphi 0, %s69
      %s71 = sphi 0, %s69
      %s72 = sphi 0, %s71
      %s86 = sphi 0, %s72
      %s90 = sphi 0, %s90
      %s92 = sphi 0, %s90
      %s93 = sphi 0, %s92
      %s107 = sphi 0, %s93
      %s113 = sphi 0, %s115
      %s116 = sphi 0, %s113
      %s117 = sphi 0, %s116
      %s133 = sphi 0, %s117
      %s139 = sphi 0, %s141
      %s142 = sphi 0, %s139
      %s143 = sphi 0, %s142
      %s159 = sphi 0, %s143
      %s165 = sphi 0, %s167
      %s168 = sphi 0, %s165
      %s169 = sphi 0, %s168
      %s185 = sphi 0, %s169
      %s191 = sphi 0, %s193
      %s194 = sphi 0, %s191
      %s195 = sphi 0, %s194
      %s211 = sphi 0, %s195
      %s217 = sphi 0, %s219
      %s220 = sphi 0, %s217
      %s221 = sphi 0, %s220
      %s237 = sphi 0, %s221
      %s243 = sphi 0, %s245
      %s246 = sphi 0, %s243
      %s247 = sphi 0, %s246
      %s263 = sphi 0, %s247
      %s269 = sphi 0, %s271
      %s272 = sphi 0, %s269
      %s273 = sphi 0, %s272
      %s289 = sphi 0, %s273
      %s295 = sphi 0, %s297
      %s298 = sphi 0, %s295
      %s299 = sphi 0, %s298
      %s315 = sphi 0, %s299
      %s321 = sphi 0, %s323
      %s324 = sphi 0, %s321
      %s325 = sphi 0, %s324
      %s341 = sphi 0, %s325
      %s347 = sphi 0, %s349
      %s350 = sphi 0, %s347
      %s351 = sphi 0, %s350
      %s367 = sphi 0, %s351
      %s373 = sphi 0, %s375
      %s376 = sphi 0, %s373
      %s377 = sphi 0, %s376
      %s393 = sphi 0, %s377
    $region4: #{tpu_custom_call.1} parent=1 // loop_header_branch
      %26 = sbr.rel (%p24) target = $region8
    $region5: #{tpu_custom_call.1} parent=1 // loop_body
      %s28 = ssub.s32 %s23, 1
      %s29 = ssub.s32 %s23, 2
      %s36 = sadd.s32 1, %s31
      %p37 = scmp.ge.s32.totalorder %s36, 2
      %s38 = scalar_select %p37, 0, %s36
      %s39 = sadd.s32 1, %s30
      %s40 = scalar_select %p37, %s39, %s30
      %p41 = scmp.ge.s32.totalorder %s40, 1
      %s42 = scalar_select %p41, 0, %s40
      %s43 = ssub.s32 %s30, %s42
      %p44 = scmp.eq.s32.totalorder %s43, 0
      %s46 = sadd.s32 %s45, 1
      %s47 = scalar_select %p44, %s45, %s46
      %p50 = pneg %p44
      %p51 = scmp.eq.s32.totalorder %s23, 1
      %p52 = por %p50, %p51
      %p53 = scmp.ne.s32.totalorder %s45, %s48
      %p54 = scmp.eq.s32.totalorder %s23, 0
      %p55 = por %p53, %p54
      %p56 = scmp.ne.s32.totalorder %s45, %s48
      %p57 = scmp.eq.s32.totalorder %s28, 1
      %p58 = por %p56, %p57
      %p59 = scmp.ne.s32.totalorder %s48, %s49
      %p60 = scmp.eq.s32.totalorder %s28, 0
      %p61 = por %p59, %p60
      %p62 = scmp.ne.s32.totalorder %s48, %s49
      %p63 = scmp.eq.s32.totalorder %s29, 1
      %p64 = por %p62, %p63
      %p66 = scmp.ne.s32.totalorder %s49, %s65
      %p67 = scmp.eq.s32.totalorder %s29, 0
      %p68 = por %p66, %p67
      %s70 = sadd.s32 %s69, 1
      %p73 = scmp.eq.s32.totalorder %s23, 1
      %p74 = scmp.ne.s32.totalorder %s69, %s71
      %p75 = scmp.eq.s32.totalorder %s23, 0
      %p76 = por %p74, %p75
      %p77 = scmp.ne.s32.totalorder %s69, %s71
      %p78 = scmp.eq.s32.totalorder %s28, 1
      %p79 = por %p77, %p78
      %p80 = scmp.ne.s32.totalorder %s71, %s72
      %p81 = scmp.eq.s32.totalorder %s28, 0
      %p82 = por %p80, %p81
      %p83 = scmp.ne.s32.totalorder %s71, %s72
      %p84 = scmp.eq.s32.totalorder %s29, 1
      %p85 = por %p83, %p84
      %p87 = scmp.ne.s32.totalorder %s72, %s86
      %p88 = scmp.eq.s32.totalorder %s29, 0
      %p89 = por %p87, %p88
      %s91 = sadd.s32 %s90, 1
      %p94 = scmp.eq.s32.totalorder %s23, 1
      %p95 = scmp.ne.s32.totalorder %s90, %s92
      %p96 = scmp.eq.s32.totalorder %s23, 0
      %p97 = por %p95, %p96
      %p98 = scmp.ne.s32.totalorder %s90, %s92
      %p99 = scmp.eq.s32.totalorder %s28, 1
      %p100 = por %p98, %p99
      %p101 = scmp.ne.s32.totalorder %s92, %s93
      %p102 = scmp.eq.s32.totalorder %s28, 0
      %p103 = por %p101, %p102
      %p104 = scmp.ne.s32.totalorder %s92, %s93
      %p105 = scmp.eq.s32.totalorder %s29, 1
      %p106 = por %p104, %p105
      %p108 = scmp.ne.s32.totalorder %s93, %s107
      %p109 = scmp.eq.s32.totalorder %s29, 0
      %p110 = por %p108, %p109
      %s111 = ssub.s32 %s31, %s38
      %p112 = scmp.eq.s32.totalorder %s111, 0
      %s114 = sadd.s32 %s113, 1
      %s115 = scalar_select %p112, %s113, %s114
      %p118 = pneg %p112
      %p119 = scmp.eq.s32.totalorder %s23, 1
      %p120 = por %p118, %p119
      %p121 = scmp.ne.s32.totalorder %s113, %s116
      %p122 = scmp.eq.s32.totalorder %s23, 0
      %p123 = por %p121, %p122
      %p124 = scmp.ne.s32.totalorder %s113, %s116
      %p125 = scmp.eq.s32.totalorder %s28, 1
      %p126 = por %p124, %p125
      %p127 = scmp.ne.s32.totalorder %s116, %s117
      %p128 = scmp.eq.s32.totalorder %s28, 0
      %p129 = por %p127, %p128
      %p130 = scmp.ne.s32.totalorder %s116, %s117
      %p131 = scmp.eq.s32.totalorder %s29, 1
      %p132 = por %p130, %p131
      %p134 = scmp.ne.s32.totalorder %s117, %s133
      %p135 = scmp.eq.s32.totalorder %s29, 0
      %p136 = por %p134, %p135
      %s137 = ssub.s32 %s31, %s38
      %p138 = scmp.eq.s32.totalorder %s137, 0
      %s140 = sadd.s32 %s139, 1
      %s141 = scalar_select %p138, %s139, %s140
      %p144 = pneg %p138
      %p145 = scmp.eq.s32.totalorder %s23, 1
      %p146 = por %p144, %p145
      %p147 = scmp.ne.s32.totalorder %s139, %s142
      %p148 = scmp.eq.s32.totalorder %s23, 0
      %p149 = por %p147, %p148
      %p150 = scmp.ne.s32.totalorder %s139, %s142
      %p151 = scmp.eq.s32.totalorder %s28, 1
      %p152 = por %p150, %p151
      %p153 = scmp.ne.s32.totalorder %s142, %s143
      %p154 = scmp.eq.s32.totalorder %s28, 0
      %p155 = por %p153, %p154
      %p156 = scmp.ne.s32.totalorder %s142, %s143
      %p157 = scmp.eq.s32.totalorder %s29, 1
      %p158 = por %p156, %p157
      %p160 = scmp.ne.s32.totalorder %s143, %s159
      %p161 = scmp.eq.s32.totalorder %s29, 0
      %p162 = por %p160, %p161
      %s163 = ssub.s32 %s31, %s38
      %p164 = scmp.eq.s32.totalorder %s163, 0
      %s166 = sadd.s32 %s165, 1
      %s167 = scalar_select %p164, %s165, %s166
      %p170 = pneg %p164
      %p171 = scmp.eq.s32.totalorder %s23, 1
      %p172 = por %p170, %p171
      %p173 = scmp.ne.s32.totalorder %s165, %s168
      %p174 = scmp.eq.s32.totalorder %s23, 0
      %p175 = por %p173, %p174
      %p176 = scmp.ne.s32.totalorder %s165, %s168
      %p177 = scmp.eq.s32.totalorder %s28, 1
      %p178 = por %p176, %p177
      %p179 = scmp.ne.s32.totalorder %s168, %s169
      %p180 = scmp.eq.s32.totalorder %s28, 0
      %p181 = por %p179, %p180
      %p182 = scmp.ne.s32.totalorder %s168, %s169
      %p183 = scmp.eq.s32.totalorder %s29, 1
      %p184 = por %p182, %p183
      %p186 = scmp.ne.s32.totalorder %s169, %s185
      %p187 = scmp.eq.s32.totalorder %s29, 0
      %p188 = por %p186, %p187
      %s189 = ssub.s32 %s31, %s38
      %p190 = scmp.eq.s32.totalorder %s189, 0
      %s192 = sadd.s32 %s191, 1
      %s193 = scalar_select %p190, %s191, %s192
      %p196 = pneg %p190
      %p197 = scmp.eq.s32.totalorder %s23, 1
      %p198 = por %p196, %p197
      %p199 = scmp.ne.s32.totalorder %s191, %s194
      %p200 = scmp.eq.s32.totalorder %s23, 0
      %p201 = por %p199, %p200
      %p202 = scmp.ne.s32.totalorder %s191, %s194
      %p203 = scmp.eq.s32.totalorder %s28, 1
      %p204 = por %p202, %p203
      %p205 = scmp.ne.s32.totalorder %s194, %s195
      %p206 = scmp.eq.s32.totalorder %s28, 0
      %p207 = por %p205, %p206
      %p208 = scmp.ne.s32.totalorder %s194, %s195
      %p209 = scmp.eq.s32.totalorder %s29, 1
      %p210 = por %p208, %p209
      %p212 = scmp.ne.s32.totalorder %s195, %s211
      %p213 = scmp.eq.s32.totalorder %s29, 0
      %p214 = por %p212, %p213
      %s215 = ssub.s32 %s31, %s38
      %p216 = scmp.eq.s32.totalorder %s215, 0
      %s218 = sadd.s32 %s217, 1
      %s219 = scalar_select %p216, %s217, %s218
      %p222 = pneg %p216
      %p223 = scmp.eq.s32.totalorder %s23, 1
      %p224 = por %p222, %p223
      %p225 = scmp.ne.s32.totalorder %s217, %s220
      %p226 = scmp.eq.s32.totalorder %s23, 0
      %p227 = por %p225, %p226
      %p228 = scmp.ne.s32.totalorder %s217, %s220
      %p229 = scmp.eq.s32.totalorder %s28, 1
      %p230 = por %p228, %p229
      %p231 = scmp.ne.s32.totalorder %s220, %s221
      %p232 = scmp.eq.s32.totalorder %s28, 0
      %p233 = por %p231, %p232
      %p234 = scmp.ne.s32.totalorder %s220, %s221
      %p235 = scmp.eq.s32.totalorder %s29, 1
      %p236 = por %p234, %p235
      %p238 = scmp.ne.s32.totalorder %s221, %s237
      %p239 = scmp.eq.s32.totalorder %s29, 0
      %p240 = por %p238, %p239
      %s241 = ssub.s32 %s31, %s38
      %p242 = scmp.eq.s32.totalorder %s241, 0
      %s244 = sadd.s32 %s243, 1
      %s245 = scalar_select %p242, %s243, %s244
      %p248 = pneg %p242
      %p249 = scmp.eq.s32.totalorder %s23, 1
      %p250 = por %p248, %p249
      %p251 = scmp.ne.s32.totalorder %s243, %s246
      %p252 = scmp.eq.s32.totalorder %s23, 0
      %p253 = por %p251, %p252
      %p254 = scmp.ne.s32.totalorder %s243, %s246
      %p255 = scmp.eq.s32.totalorder %s28, 1
      %p256 = por %p254, %p255
      %p257 = scmp.ne.s32.totalorder %s246, %s247
      %p258 = scmp.eq.s32.totalorder %s28, 0
      %p259 = por %p257, %p258
      %p260 = scmp.ne.s32.totalorder %s246, %s247
      %p261 = scmp.eq.s32.totalorder %s29, 1
      %p262 = por %p260, %p261
      %p264 = scmp.ne.s32.totalorder %s247, %s263
      %p265 = scmp.eq.s32.totalorder %s29, 0
      %p266 = por %p264, %p265
      %s267 = ssub.s32 %s31, %s38
      %p268 = scmp.eq.s32.totalorder %s267, 0
      %s270 = sadd.s32 %s269, 1
      %s271 = scalar_select %p268, %s269, %s270
      %p274 = pneg %p268
      %p275 = scmp.eq.s32.totalorder %s23, 1
      %p276 = por %p274, %p275
      %p277 = scmp.ne.s32.totalorder %s269, %s272
      %p278 = scmp.eq.s32.totalorder %s23, 0
      %p279 = por %p277, %p278
      %p280 = scmp.ne.s32.totalorder %s269, %s272
      %p281 = scmp.eq.s32.totalorder %s28, 1
      %p282 = por %p280, %p281
      %p283 = scmp.ne.s32.totalorder %s272, %s273
      %p284 = scmp.eq.s32.totalorder %s28, 0
      %p285 = por %p283, %p284
      %p286 = scmp.ne.s32.totalorder %s272, %s273
      %p287 = scmp.eq.s32.totalorder %s29, 1
      %p288 = por %p286, %p287
      %p290 = scmp.ne.s32.totalorder %s273, %s289
      %p291 = scmp.eq.s32.totalorder %s29, 0
      %p292 = por %p290, %p291
      %s293 = ssub.s32 %s31, %s38
      %p294 = scmp.eq.s32.totalorder %s293, 0
      %s296 = sadd.s32 %s295, 1
      %s297 = scalar_select %p294, %s295, %s296
      %p300 = pneg %p294
      %p301 = scmp.eq.s32.totalorder %s23, 1
      %p302 = por %p300, %p301
      %p303 = scmp.ne.s32.totalorder %s295, %s298
      %p304 = scmp.eq.s32.totalorder %s23, 0
      %p305 = por %p303, %p304
      %p306 = scmp.ne.s32.totalorder %s295, %s298
      %p307 = scmp.eq.s32.totalorder %s28, 1
      %p308 = por %p306, %p307
      %p309 = scmp.ne.s32.totalorder %s298, %s299
      %p310 = scmp.eq.s32.totalorder %s28, 0
      %p311 = por %p309, %p310
      %p312 = scmp.ne.s32.totalorder %s298, %s299
      %p313 = scmp.eq.s32.totalorder %s29, 1
      %p314 = por %p312, %p313
      %p316 = scmp.ne.s32.totalorder %s299, %s315
      %p317 = scmp.eq.s32.totalorder %s29, 0
      %p318 = por %p316, %p317
      %s319 = ssub.s32 %s31, %s38
      %p320 = scmp.eq.s32.totalorder %s319, 0
      %s322 = sadd.s32 %s321, 1
      %s323 = scalar_select %p320, %s321, %s322
      %p326 = pneg %p320
      %p327 = scmp.eq.s32.totalorder %s23, 1
      %p328 = por %p326, %p327
      %p329 = scmp.ne.s32.totalorder %s321, %s324
      %p330 = scmp.eq.s32.totalorder %s23, 0
      %p331 = por %p329, %p330
      %p332 = scmp.ne.s32.totalorder %s321, %s324
      %p333 = scmp.eq.s32.totalorder %s28, 1
      %p334 = por %p332, %p333
      %p335 = scmp.ne.s32.totalorder %s324, %s325
      %p336 = scmp.eq.s32.totalorder %s28, 0
      %p337 = por %p335, %p336
      %p338 = scmp.ne.s32.totalorder %s324, %s325
      %p339 = scmp.eq.s32.totalorder %s29, 1
      %p340 = por %p338, %p339
      %p342 = scmp.ne.s32.totalorder %s325, %s341
      %p343 = scmp.eq.s32.totalorder %s29, 0
      %p344 = por %p342, %p343
      %s345 = ssub.s32 %s31, %s38
      %p346 = scmp.eq.s32.totalorder %s345, 0
      %s348 = sadd.s32 %s347, 1
      %s349 = scalar_select %p346, %s347, %s348
      %p352 = pneg %p346
      %p353 = scmp.eq.s32.totalorder %s23, 1
      %p354 = por %p352, %p353
      %p355 = scmp.ne.s32.totalorder %s347, %s350
      %p356 = scmp.eq.s32.totalorder %s23, 0
      %p357 = por %p355, %p356
      %p358 = scmp.ne.s32.totalorder %s347, %s350
      %p359 = scmp.eq.s32.totalorder %s28, 1
      %p360 = por %p358, %p359
      %p361 = scmp.ne.s32.totalorder %s350, %s351
      %p362 = scmp.eq.s32.totalorder %s28, 0
      %p363 = por %p361, %p362
      %p364 = scmp.ne.s32.totalorder %s350, %s351
      %p365 = scmp.eq.s32.totalorder %s29, 1
      %p366 = por %p364, %p365
      %p368 = scmp.ne.s32.totalorder %s351, %s367
      %p369 = scmp.eq.s32.totalorder %s29, 0
      %p370 = por %p368, %p369
      %s371 = ssub.s32 %s30, %s42
      %p372 = scmp.eq.s32.totalorder %s371, 0
      %s374 = sadd.s32 %s373, 1
      %s375 = scalar_select %p372, %s373, %s374
      %p378 = pneg %p372
      %p379 = scmp.eq.s32.totalorder %s23, 1
      %p380 = por %p378, %p379
      %p381 = scmp.ne.s32.totalorder %s373, %s376
      %p382 = scmp.eq.s32.totalorder %s23, 0
      %p383 = por %p381, %p382
      %p384 = scmp.ne.s32.totalorder %s373, %s376
      %p385 = scmp.eq.s32.totalorder %s28, 1
      %p386 = por %p384, %p385
      %p387 = scmp.ne.s32.totalorder %s376, %s377
      %p388 = scmp.eq.s32.totalorder %s28, 0
      %p389 = por %p387, %p388
      %p390 = scmp.ne.s32.totalorder %s376, %s377
      %p391 = scmp.eq.s32.totalorder %s29, 1
      %p392 = por %p390, %p391
      %p394 = scmp.ne.s32.totalorder %s377, %s393
      %p395 = scmp.eq.s32.totalorder %s29, 0
      %p396 = por %p394, %p395
      %p397 = scmp.le.s32.totalorder 1, %s23
      %p398 = scmp.lt.s32.totalorder %s23, 3
      %p399 = pnand %p397, %p398
      %p400 = pneg %p399
      // Predicated region
      $region9: #{tpu_custom_call.1} parent=5 // pred_check
        _
      $region10: #{tpu_custom_call.1} parent=5 // pred_check_branch
        %402 = sbr.rel (%p399) target = $region12
      $region11: #{tpu_custom_call.1} parent=5 // pred_region
        %s403 = ssub.s32 %s23, 1
        // Predicated region
        $region13: #{tpu_custom_call.1} parent=11 // pred_check
          %p404 = pneg %p61
        $region14: #{tpu_custom_call.1} parent=11 // pred_check_branch
          %406 = sbr.rel (%p404) target = $region16
        $region15: #{tpu_custom_call.1} parent=11 // pred_region
          %s407 = smul.u32 2, %s32
          %p408 = scmp.lt.s32.totalorder %s407, 1
          %s409 = scalar_select %p408, %s407, 1
          %s410 = smul.addr %s409, 8
          %s411 = scalar_lea.vmem %s0, %s410
          %s412 = smul.u32 2, %s32
        $region16: #{tpu_custom_call.1} parent=11 // pred_fallthru
          _
        // Predicated region
        $region17: #{tpu_custom_call.1} parent=11 // pred_check
          %p413 = pneg %p82
        $region18: #{tpu_custom_call.1} parent=11 // pred_check_branch
          %415 = sbr.rel (%p413) target = $region20
        $region19: #{tpu_custom_call.1} parent=11 // pred_region
          _
        $region20: #{tpu_custom_call.1} parent=11 // pred_fallthru
          _
        // Predicated region
        $region21: #{tpu_custom_call.1} parent=11 // pred_check
          %p416 = pneg %p103
        $region22: #{tpu_custom_call.1} parent=11 // pred_check_branch
          %418 = sbr.rel (%p416) target = $region24
        $region23: #{tpu_custom_call.1} parent=11 // pred_region
          _
        $region24: #{tpu_custom_call.1} parent=11 // pred_fallthru
          _
      $region12: #{tpu_custom_call.1} parent=5 // pred_fallthru
        _
      %p419 = scmp.lt.s32.totalorder %s23, 2
      // Predicated region
      $region25: #{tpu_custom_call.1} parent=5 // pred_check
        %p420 = pneg %p419
      $region26: #{tpu_custom_call.1} parent=5 // pred_check_branch
        %422 = sbr.rel (%p420) target = $region28
      $region27: #{tpu_custom_call.1} parent=5 // pred_region
        // Predicated region
        $region29: #{tpu_custom_call.1} parent=27 // pred_check
          %p423 = pneg %p123
        $region30: #{tpu_custom_call.1} parent=27 // pred_check_branch
          %425 = sbr.rel (%p423) target = $region32
        $region31: #{tpu_custom_call.1} parent=27 // pred_region
          %p426 = scmp.lt.s32.totalorder %s31, 1
          %s427 = scalar_select %p426, %s31, 1
          %s428 = smul.addr %s427, 16
          %s429 = smul.addr %s428, 4
          %s430 = scalar_lea.vmem %s3, %s429
        $region32: #{tpu_custom_call.1} parent=27 // pred_fallthru
          _
        // Predicated region
        $region33: #{tpu_custom_call.1} parent=27 // pred_check
          %p431 = pneg %p149
        $region34: #{tpu_custom_call.1} parent=27 // pred_check_branch
          %433 = sbr.rel (%p431) target = $region36
        $region35: #{tpu_custom_call.1} parent=27 // pred_region
          %p434 = scmp.lt.s32.totalorder %s31, 1
          %s435 = scalar_select %p434, %s31, 1
          %s436 = smul.addr %s435, 2
          %s437 = smul.addr %s436, 4
          %s438 = scalar_lea.vmem %s4, %s437
        $region36: #{tpu_custom_call.1} parent=27 // pred_fallthru
          _
        // Predicated region
        $region37: #{tpu_custom_call.1} parent=27 // pred_check
          %p439 = pneg %p175
        $region38: #{tpu_custom_call.1} parent=27 // pred_check_branch
          %441 = sbr.rel (%p439) target = $region40
        $region39: #{tpu_custom_call.1} parent=27 // pred_region
          %p442 = scmp.lt.s32.totalorder %s31, 1
          %s443 = scalar_select %p442, %s31, 1
          %s444 = scalar_lea.vmem %s5, %s443
        $region40: #{tpu_custom_call.1} parent=27 // pred_fallthru
          _
        // Predicated region
        $region41: #{tpu_custom_call.1} parent=27 // pred_check
          %p445 = pneg %p201
        $region42: #{tpu_custom_call.1} parent=27 // pred_check_branch
          %447 = sbr.rel (%p445) target = $region44
        $region43: #{tpu_custom_call.1} parent=27 // pred_region
          %p448 = scmp.lt.s32.totalorder %s31, 1
          %s449 = scalar_select %p448, %s31, 1
          %s450 = scalar_lea.vmem %s6, %s449
        $region44: #{tpu_custom_call.1} parent=27 // pred_fallthru
          _
        // Predicated region
        $region45: #{tpu_custom_call.1} parent=27 // pred_check
          %p451 = pneg %p227
        $region46: #{tpu_custom_call.1} parent=27 // pred_check_branch
          %453 = sbr.rel (%p451) target = $region48
        $region47: #{tpu_custom_call.1} parent=27 // pred_region
          %p454 = scmp.lt.s32.totalorder %s31, 1
          %s455 = scalar_select %p454, %s31, 1
          %s456 = smul.addr %s455, 16
          %s457 = smul.addr %s456, 4
          %s458 = scalar_lea.vmem %s7, %s457
        $region48: #{tpu_custom_call.1} parent=27 // pred_fallthru
          _
        // Predicated region
        $region49: #{tpu_custom_call.1} parent=27 // pred_check
          %p459 = pneg %p253
        $region50: #{tpu_custom_call.1} parent=27 // pred_check_branch
          %461 = sbr.rel (%p459) target = $region52
        $region51: #{tpu_custom_call.1} parent=27 // pred_region
          %p462 = scmp.lt.s32.totalorder %s31, 1
          %s463 = scalar_select %p462, %s31, 1
          %s464 = scalar_lea.vmem %s8, %s463
        $region52: #{tpu_custom_call.1} parent=27 // pred_fallthru
          _
        // Predicated region
        $region53: #{tpu_custom_call.1} parent=27 // pred_check
          %p465 = pneg %p279
        $region54: #{tpu_custom_call.1} parent=27 // pred_check_branch
          %467 = sbr.rel (%p465) target = $region56
        $region55: #{tpu_custom_call.1} parent=27 // pred_region
          %s468 = sand.u32 %s269, 1
          %s469 = scalar_lea.sflag [#allocation3], %s468
          %s470 = sand.u32 %s269, 1
          %s471 = smul.addr %s470, 64
          %s472 = scalar_lea.vmem [#allocation2], %s471
          %474 = vsyncadd %s469, 0
          %s475 = smul.addr %s31, 16
          %s476 = smul.addr %s475, 4
          %s477 = scalar_lea.hbm %s9, %s476
          %s478 = sshll.u32 %s477, 4
          %s479 = int_to_ptr.hbm [resolvable:$true] %s478
          %s480 = sshll.u32 %s472, 4
          %s481 = int_to_ptr.vmem [resolvable:$true] %s480
          %486 = dma.hbm_to_vmem [thread:$0]  %s479, 1024, %s481, %s469, 64, 64, 4
        $region56: #{tpu_custom_call.1} parent=27 // pred_fallthru
          _
        // Predicated region
        $region57: #{tpu_custom_call.1} parent=27 // pred_check
          %p487 = pneg %p305
        $region58: #{tpu_custom_call.1} parent=27 // pred_check_branch
          %489 = sbr.rel (%p487) target = $region60
        $region59: #{tpu_custom_call.1} parent=27 // pred_region
          %p490 = scmp.lt.s32.totalorder %s31, 1
          %s491 = scalar_select %p490, %s31, 1
          %s492 = scalar_lea.vmem %s10, %s491
        $region60: #{tpu_custom_call.1} parent=27 // pred_fallthru
          _
        // Predicated region
        $region61: #{tpu_custom_call.1} parent=27 // pred_check
          %p493 = pneg %p331
        $region62: #{tpu_custom_call.1} parent=27 // pred_check_branch
          %495 = sbr.rel (%p493) target = $region64
        $region63: #{tpu_custom_call.1} parent=27 // pred_region
          %p496 = scmp.lt.s32.totalorder %s31, 1
          %s497 = scalar_select %p496, %s31, 1
          %s498 = scalar_lea.vmem %s11, %s497
        $region64: #{tpu_custom_call.1} parent=27 // pred_fallthru
          _
        // Predicated region
        $region65: #{tpu_custom_call.1} parent=27 // pred_check
          %p499 = pneg %p357
        $region66: #{tpu_custom_call.1} parent=27 // pred_check_branch
          %501 = sbr.rel (%p499) target = $region68
        $region67: #{tpu_custom_call.1} parent=27 // pred_region
          %p502 = scmp.lt.s32.totalorder %s31, 1
          %s503 = scalar_select %p502, %s31, 1
          %s504 = scalar_lea.vmem %s12, %s503
        $region68: #{tpu_custom_call.1} parent=27 // pred_fallthru
          _
      $region28: #{tpu_custom_call.1} parent=5 // pred_fallthru
        _
      %p505 = scmp.le.s32.totalorder 1, %s23
      %p506 = scmp.lt.s32.totalorder %s23, 3
      %p507 = pnand %p505, %p506
      %p508 = pneg %p507
      // Predicated region
      $region69: #{tpu_custom_call.1} parent=5 // pred_check
        _
      $region70: #{tpu_custom_call.1} parent=5 // pred_check_branch
        %510 = sbr.rel (%p507) target = $region72
      $region71: #{tpu_custom_call.1} parent=5 // pred_region
        %s511 = ssub.s32 %s23, 1
        %s512 = sand.u32 %s272, 1
        %s513 = scalar_lea.sflag [#allocation3], %s512
        %s514 = sand.u32 %s272, 1
        %s515 = smul.addr %s514, 64
        %s516 = scalar_lea.vmem [#allocation2], %s515
        // Predicated region
        $region73: #{tpu_custom_call.1} parent=71 // pred_check
          %p517 = pneg %p285
        $region74: #{tpu_custom_call.1} parent=71 // pred_check_branch
          %519 = sbr.rel (%p517) target = $region76
        $region75: #{tpu_custom_call.1} parent=71 // pred_region
          %521 = dma.done %s513, 1024
        $region76: #{tpu_custom_call.1} parent=71 // pred_fallthru
          _
        %s522 = smul.u32 2, %s32
        %p523 = scmp.lt.s32.totalorder %s522, 1
        %s524 = scalar_select %p523, %s522, 1
        %s525 = smul.addr %s524, 8
        %s526 = scalar_lea.vmem %s0, %s525
        %p527 = pneg %p61
        %p528 = pneg %p58
        %p529 = pneg %p82
        %p530 = pneg %p79
        %p531 = pneg %p103
        %p532 = pneg %p100
        %p533 = scmp.lt.s32.totalorder %s33, 1
        %s534 = scalar_select %p533, %s33, 1
        %s535 = smul.addr %s534, 16
        %s536 = smul.addr %s535, 4
        %s537 = scalar_lea.vmem %s3, %s536
        %p538 = pneg %p129
        %p539 = pneg %p126
        %p540 = scmp.lt.s32.totalorder %s33, 1
        %s541 = scalar_select %p540, %s33, 1
        %s542 = smul.addr %s541, 2
        %s543 = smul.addr %s542, 4
        %s544 = scalar_lea.vmem %s4, %s543
        %p545 = pneg %p155
        %p546 = pneg %p152
        %p547 = scmp.lt.s32.totalorder %s33, 1
        %s548 = scalar_select %p547, %s33, 1
        %s549 = scalar_lea.vmem %s5, %s548
        %p550 = pneg %p181
        %p551 = pneg %p178
        %p552 = scmp.lt.s32.totalorder %s33, 1
        %s553 = scalar_select %p552, %s33, 1
        %s554 = scalar_lea.vmem %s6, %s553
        %p555 = pneg %p207
        %p556 = pneg %p204
        %p557 = scmp.lt.s32.totalorder %s33, 1
        %s558 = scalar_select %p557, %s33, 1
        %s559 = smul.addr %s558, 16
        %s560 = smul.addr %s559, 4
        %s561 = scalar_lea.vmem %s7, %s560
        %p562 = pneg %p233
        %p563 = pneg %p230
        %p564 = scmp.lt.s32.totalorder %s33, 1
        %s565 = scalar_select %p564, %s33, 1
        %s566 = scalar_lea.vmem %s8, %s565
        %p567 = pneg %p259
        %p568 = pneg %p256
        %s569 = sand.u32 %s272, 1
        %s570 = scalar_lea.sflag [#allocation3], %s569
        %s571 = sand.u32 %s272, 1
        %s572 = smul.addr %s571, 64
        %s573 = scalar_lea.vmem [#allocation2], %s572
        %p574 = pneg %p285
        %p575 = pneg %p282
        %p576 = scmp.lt.s32.totalorder %s33, 1
        %s577 = scalar_select %p576, %s33, 1
        %s578 = scalar_lea.vmem %s10, %s577
        %p579 = pneg %p311
        %p580 = pneg %p308
        %p581 = scmp.lt.s32.totalorder %s33, 1
        %s582 = scalar_select %p581, %s33, 1
        %s583 = scalar_lea.vmem %s11, %s582
        %p584 = pneg %p337
        %p585 = pneg %p334
        %p586 = scmp.lt.s32.totalorder %s33, 1
        %s587 = scalar_select %p586, %s33, 1
        %s588 = scalar_lea.vmem %s12, %s587
        %p589 = pneg %p363
        %p590 = pneg %p360
        %p591 = pneg %p389
        %p592 = pneg %p386
        %s593 = smul.u32 2, %s32
        %p594 = scmp.lt.s32.totalorder %s593, 1
        %s595 = scalar_select %p594, %s593, 1
        %s596 = smul.addr %s595, 8
        %s597 = scalar_lea.vmem %s0, %s596
        %s598 = smul.u32 2, %s32
        %p599 = scmp.lt.s32.totalorder %s33, 1
        %s600 = scalar_select %p599, %s33, 1
        %s601 = smul.addr %s600, 16
        %s602 = smul.addr %s601, 4
        %s603 = scalar_lea.vmem %s3, %s602
        %p604 = scmp.lt.s32.totalorder %s33, 1
        %s605 = scalar_select %p604, %s33, 1
        %s606 = smul.addr %s605, 2
        %s607 = smul.addr %s606, 4
        %s608 = scalar_lea.vmem %s4, %s607
        %p609 = scmp.lt.s32.totalorder %s33, 1
        %s610 = scalar_select %p609, %s33, 1
        %s611 = scalar_lea.vmem %s5, %s610
        %p612 = scmp.lt.s32.totalorder %s33, 1
        %s613 = scalar_select %p612, %s33, 1
        %s614 = scalar_lea.vmem %s6, %s613
        %p615 = scmp.lt.s32.totalorder %s33, 1
        %s616 = scalar_select %p615, %s33, 1
        %s617 = smul.addr %s616, 16
        %s618 = smul.addr %s617, 4
        %s619 = scalar_lea.vmem %s7, %s618
        %p620 = scmp.lt.s32.totalorder %s33, 1
        %s621 = scalar_select %p620, %s33, 1
        %s622 = scalar_lea.vmem %s8, %s621
        %p623 = scmp.lt.s32.totalorder %s33, 1
        %s624 = scalar_select %p623, %s33, 1
        %s625 = scalar_lea.vmem %s10, %s624
        %p626 = scmp.lt.s32.totalorder %s33, 1
        %s627 = scalar_select %p626, %s33, 1
        %s628 = scalar_lea.vmem %s11, %s627
        %p629 = scmp.lt.s32.totalorder %s33, 1
        %s630 = scalar_select %p629, %s33, 1
        %s631 = scalar_lea.vmem %s12, %s630
        %s632 = smul.u32 2, %s32
        %p634 = scmp.eq.s32.totalorder %s33, 0
        // Predicated region
        $region77: #{tpu_custom_call.1} parent=71 // pred_check
          %p635 = pneg %p634
        $region78: #{tpu_custom_call.1} parent=71 // pred_check_branch
          %637 = sbr.rel (%p635) target = $region80
        $region79: #{tpu_custom_call.1} parent=71 // pred_region
          %v638 = vld [vmem:[%s597] sm:$0xff]
          %v639 = vld [vmem:[%s597 + $0x8] sm:$0xff]
          %v640 = vld [vmem:[%s1] sm:$0x1]
          %v641 = vld [vmem:[%s2] sm:$0x1]
          %642 = vadd.xlane.f32.xlu0 %v638
          %v643 = vpop.xlane.xlu0 %642
          %644 = vadd.xlane.f32.xlu0 %v639
          %v645 = vpop.xlane.xlu0 %644
          %v646 = vmul.f32 %v643, 0.03125
          %v647 = vmul.f32 %v645, 0.03125
          %v648 = vsub.f32 %v638, %v646
          %v649 = vsub.f32 %v639, %v647
          %v650 = vlaneseq
          %v651 = vand.u32 %v650, 127
          %vm652 = vcmp.lt.s32.totalorder %v651, 32
          %v653 = vsel %vm652, 1, 0
          %v654 = vcvt.s32.f32 %v653
          %v655 = vmul.f32 %v648, %v654
          %v656 = vmul.f32 %v649, %v654
          %v657 = vmul.f32 %v655, %v655
          %v658 = vmul.f32 %v656, %v656
          %659 = vadd.xlane.f32.xlu0 %v657
          %v660 = vpop.xlane.xlu0 %659
          %661 = vadd.xlane.f32.xlu0 %v658
          %v662 = vpop.xlane.xlu0 %661
          %v663 = vmul.f32 %v660, 0.03125
          %v664 = vmul.f32 %v662, 0.03125
          %v665 = vadd.f32 %v663, 1e-06
          %v666 = vadd.f32 %v664, 1e-06
          %v667 = vrsqrt.pop %v665
          %v668 = vmul.f32 %v667, %v665
          %v669 = vmul.f32 %v668, %v667
          %v670 = vmul.f32 0.5, %v669
          %v671 = vsub.f32 1.5, %v670
          %v672 = vmul.f32 %v667, %v671
          %vm673 = vweird.f32 %v665
          %vm674 = vweird.f32 %v667
          %vm675 = vmor %vm673, %vm674
          %v676 = vsel %vm675, %v667, %v672
          %v677 = vrsqrt.pop %v666
          %v678 = vmul.f32 %v677, %v666
          %v679 = vmul.f32 %v678, %v677
          %v680 = vmul.f32 0.5, %v679
          %v681 = vsub.f32 1.5, %v680
          %v682 = vmul.f32 %v677, %v681
          %vm683 = vweird.f32 %v666
          %vm684 = vweird.f32 %v677
          %vm685 = vmor %vm683, %vm684
          %v686 = vsel %vm685, %v677, %v682
          %v687 = vmul.f32 %v655, %v676
          %v688 = vmul.f32 %v656, %v686
          %v690 = vperm.slane %v640, 0
          %v692 = vmul.f32 %v687, %v690
          %v693 = vmul.f32 %v688, %v690
          %v695 = vperm.slane %v641, 0
          %v697 = vadd.f32 %v692, %v695
          %v698 = vadd.f32 %v693, %v695
          %699 = vst [vmem:[#allocation5] sm:$0xff] %v697
          %700 = vst [vmem:[#allocation5 + $0x8] sm:$0xff] %v698
        $region80: #{tpu_custom_call.1} parent=71 // pred_fallthru
          _
        %v701 = vld [vmem:[#allocation5] sm:$0xff]
        %v702 = vld [vmem:[#allocation5 + $0x8] sm:$0xff]
        %v703 = vpack.c.bf16 %v702, %v701
        %v704 = vld [vmem:[%s603] sm:$0xf]
        %v705 = vld [vmem:[%s603 + $0x4] sm:$0xf]
        %v706 = vld [vmem:[%s603 + $0x8] sm:$0xf]
        %v707 = vld [vmem:[%s603 + $0xc] sm:$0xf]
        %v708 = vld [vmem:[%s603 + $0x10] sm:$0xf]
        %v709 = vld [vmem:[%s603 + $0x14] sm:$0xf]
        %v710 = vld [vmem:[%s603 + $0x18] sm:$0xf]
        %v711 = vld [vmem:[%s603 + $0x1c] sm:$0xf]
        %v712 = vld [vmem:[%s603 + $0x20] sm:$0xf]
        %v713 = vld [vmem:[%s603 + $0x24] sm:$0xf]
        %v714 = vld [vmem:[%s603 + $0x28] sm:$0xf]
        %v715 = vld [vmem:[%s603 + $0x2c] sm:$0xf]
        %v716 = vld [vmem:[%s603 + $0x30] sm:$0xf]
        %v717 = vld [vmem:[%s603 + $0x34] sm:$0xf]
        %v718 = vld [vmem:[%s603 + $0x38] sm:$0xf]
        %v719 = vld [vmem:[%s603 + $0x3c] sm:$0xf]
        %v736 = vunpack.c.l.b16 %v704
        %v737 = vunpack.c.l.b16 %v705
        %v738 = vunpack.c.l.b16 %v706
        %v739 = vunpack.c.l.b16 %v707
        %v740 = vunpack.c.l.b16 %v708
        %v741 = vunpack.c.l.b16 %v709
        %v742 = vunpack.c.l.b16 %v710
        %v743 = vunpack.c.l.b16 %v711
        %v744 = vunpack.c.l.b16 %v712
        %v745 = vunpack.c.l.b16 %v713
        %v746 = vunpack.c.l.b16 %v714
        %v747 = vunpack.c.l.b16 %v715
        %v748 = vunpack.c.l.b16 %v716
        %v749 = vunpack.c.l.b16 %v717
        %v750 = vunpack.c.l.b16 %v718
        %v751 = vunpack.c.l.b16 %v719
        %v752 = vpack.c.b16 %v737, %v736
        %v753 = vpack.c.b16 %v739, %v738
        %v754 = vpack.c.b16 %v741, %v740
        %v755 = vpack.c.b16 %v743, %v742
        %v756 = vpack.c.b16 %v745, %v744
        %v757 = vpack.c.b16 %v747, %v746
        %v758 = vpack.c.b16 %v749, %v748
        %v759 = vpack.c.b16 %v751, %v750
        %768 = vmatpush.bf16.msra.mxu0 %v759
        %769 = vmatpush.bf16.msra.mxu0 %v758
        %770 = vmatpush.bf16.msra.mxu0 %v757
        %771 = vmatpush.bf16.msra.mxu0 %v756
        %772 = vmatpush.bf16.msra.mxu0 %v755
        %773 = vmatpush.bf16.msra.mxu0 %v754
        %774 = vmatpush.bf16.msra.mxu0 %v753
        %775 = vmatpush.bf16.msra.mxu0 %v752
        %776 = vmatmul.bf16.gmra.mxu0 %v703
        %v777 = vpop.f32.mrf.mxu0
        %v778 = vadd.f32 0.0, %v777
        %v779 = vpop.f32.mrf.mxu0
        %v780 = vadd.f32 0.0, %v779
        %781 = vdwg.mxu0
        %v782 = vpack.c.bf16 %v778, %v778
        %v783 = vpack.c.bf16 %v780, %v780
        %786 = vrot.lane.b32.xlu0 %v782, 120
        %v787 = vpop.permute.xlu0 %786
        %788 = vrot.lane.b32.xlu0 %v783, 120
        %v789 = vpop.permute.xlu0 %788
        %v790 = vunpack.c.l.b16 %v782
        %v791 = vpack.c.b16 %v790, %v790
        %792 = vrot.lane.b32.xlu0 %v791, 112
        %v793 = vpop.permute.xlu0 %792
        %vm794 = vcmask 64512
        %v796 = vsel %vm794, %v782, 0
        %v799 = vsel %vm794, %v793, 0
        %801 = vmatpush.bf16.xpose.msra.mxu0 0
        %802 = vmatpush.bf16.xpose.msra.mxu0 0
        %803 = vmatpush.bf16.xpose.msra.mxu0 0
        %804 = vmatpush.bf16.xpose.msra.mxu0 0
        %805 = vmatpush.bf16.xpose.msra.mxu0 0
        %806 = vmatpush.bf16.xpose.msra.mxu0 0
        %807 = vmatpush.bf16.xpose.msra.mxu0 0
        %808 = vmatpush.bf16.xpose.msra.mxu0 %v799
        %809 = vmatmul.bf16.gmra.mxu0 %v796
        %v810 = vpop.f32.mrf.mxu0
        %v811 = vadd.f32 0.0, %v810
        %v812 = vpop.f32.mrf.mxu0
        %813 = vdwg.mxu0
        %v814 = vunpack.c.l.b16 %v783
        %v815 = vpack.c.b16 %v814, %v814
        %816 = vrot.lane.b32.xlu0 %v815, 112
        %v817 = vpop.permute.xlu0 %816
        %v819 = vsel %vm794, %v783, 0
        %v822 = vsel %vm794, %v817, 0
        %824 = vmatpush.bf16.xpose.msra.mxu0 0
        %825 = vmatpush.bf16.xpose.msra.mxu0 0
        %826 = vmatpush.bf16.xpose.msra.mxu0 0
        %827 = vmatpush.bf16.xpose.msra.mxu0 0
        %828 = vmatpush.bf16.xpose.msra.mxu0 0
        %829 = vmatpush.bf16.xpose.msra.mxu0 0
        %830 = vmatpush.bf16.xpose.msra.mxu0 0
        %831 = vmatpush.bf16.xpose.msra.mxu0 %v822
        %832 = vmatmul.bf16.gmra.mxu0 %v819
        %v833 = vpop.f32.mrf.mxu0
        %v834 = vadd.f32 0.0, %v833
        %v835 = vpop.f32.mrf.mxu0
        %836 = vdwg.mxu0
        %v837 = vunpack.c.l.b16 %v787
        %v838 = vpack.c.b16 %v837, %v837
        %839 = vrot.lane.b32.xlu0 %v838, 112
        %v840 = vpop.permute.xlu0 %839
        %v842 = vsel %vm794, %v787, 0
        %v845 = vsel %vm794, %v840, 0
        %847 = vmatpush.bf16.xpose.msra.mxu0 0
        %848 = vmatpush.bf16.xpose.msra.mxu0 0
        %849 = vmatpush.bf16.xpose.msra.mxu0 0
        %850 = vmatpush.bf16.xpose.msra.mxu0 0
        %851 = vmatpush.bf16.xpose.msra.mxu0 0
        %852 = vmatpush.bf16.xpose.msra.mxu0 0
        %853 = vmatpush.bf16.xpose.msra.mxu0 0
        %854 = vmatpush.bf16.xpose.msra.mxu0 %v845
        %855 = vmatmul.bf16.gmra.mxu0 %v842
        %v856 = vpop.f32.mrf.mxu0
        %v857 = vadd.f32 0.0, %v856
        %v858 = vpop.f32.mrf.mxu0
        %859 = vdwg.mxu0
        %v860 = vunpack.c.l.b16 %v789
        %v861 = vpack.c.b16 %v860, %v860
        %862 = vrot.lane.b32.xlu0 %v861, 112
        %v863 = vpop.permute.xlu0 %862
        %v865 = vsel %vm794, %v789, 0
        %v868 = vsel %vm794, %v863, 0
        %870 = vmatpush.bf16.xpose.msra.mxu0 0
        %871 = vmatpush.bf16.xpose.msra.mxu0 0
        %872 = vmatpush.bf16.xpose.msra.mxu0 0
        %873 = vmatpush.bf16.xpose.msra.mxu0 0
        %874 = vmatpush.bf16.xpose.msra.mxu0 0
        %875 = vmatpush.bf16.xpose.msra.mxu0 0
        %876 = vmatpush.bf16.xpose.msra.mxu0 0
        %877 = vmatpush.bf16.xpose.msra.mxu0 %v868
        %878 = vmatmul.bf16.gmra.mxu0 %v865
        %v879 = vpop.f32.mrf.mxu0
        %v880 = vadd.f32 0.0, %v879
        %v881 = vpop.f32.mrf.mxu0
        %882 = vdwg.mxu0
        %v883 = vsel %vm794, %v811, -inf
        %884 = vmax.xlane.f32.xlu0 %v883
        %v885 = vpop.xlane.xlu0 %884
        %v886 = vsel %vm794, %v834, -inf
        %887 = vmax.xlane.f32.xlu0 %v886
        %v888 = vpop.xlane.xlu0 %887
        %v889 = vsel %vm794, %v857, -inf
        %890 = vmax.xlane.f32.xlu0 %v889
        %v891 = vpop.xlane.xlu0 %890
        %v892 = vsel %vm794, %v880, -inf
        %893 = vmax.xlane.f32.xlu0 %v892
        %v894 = vpop.xlane.xlu0 %893
        %v895 = vsub.f32 %v811, %v885
        %v896 = vsub.f32 %v834, %v888
        %v897 = vsub.f32 %v857, %v891
        %v898 = vsub.f32 %v880, %v894
        %v899 = vmul.f32 %v895, 1.442695
        %v900 = vpow.pop %v899
        %v901 = vmul.f32 %v896, 1.442695
        %v902 = vpow.pop %v901
        %v903 = vmul.f32 %v897, 1.442695
        %v904 = vpow.pop %v903
        %v905 = vmul.f32 %v898, 1.442695
        %v906 = vpow.pop %v905
        %v907 = vsel %vm794, %v900, 0.0
        %908 = vadd.xlane.f32.xlu0 %v907
        %v909 = vpop.xlane.xlu0 %908
        %v910 = vsel %vm794, %v902, 0.0
        %911 = vadd.xlane.f32.xlu0 %v910
        %v912 = vpop.xlane.xlu0 %911
        %v913 = vsel %vm794, %v904, 0.0
        %914 = vadd.xlane.f32.xlu0 %v913
        %v915 = vpop.xlane.xlu0 %914
        %v916 = vsel %vm794, %v906, 0.0
        %917 = vadd.xlane.f32.xlu0 %v916
        %v918 = vpop.xlane.xlu0 %917
        %v919 = vrcp.pop %v909
        %v920 = vrcp.pop %v912
        %v921 = vrcp.pop %v915
        %v922 = vrcp.pop %v918
        %v923 = vmul.f32 %v900, %v919
        %v924 = vmul.f32 %v902, %v920
        %v925 = vmul.f32 %v904, %v921
        %v926 = vmul.f32 %v906, %v922
        %v927 = vpack.c.bf16 %v923, %v923
        %v928 = vpack.c.bf16 %v924, %v924
        %v929 = vpack.c.bf16 %v925, %v925
        %v930 = vpack.c.bf16 %v926, %v926
        %931 = vrot.lane.b32.xlu0 %v791, 96
        %v932 = vpop.permute.xlu0 %931
        %v934 = vsel %vm794, %v927, 0
        %vm936 = vcmask 1043456
        %v938 = vsel %vm936, %v932, 0
        %940 = vmatpush.bf16.msra.mxu0 0
        %941 = vmatpush.bf16.msra.mxu0 0
        %942 = vmatpush.bf16.msra.mxu0 0
        %943 = vmatpush.bf16.msra.mxu0 0
        %944 = vmatpush.bf16.msra.mxu0 0
        %945 = vmatpush.bf16.msra.mxu0 0
        %946 = vmatpush.bf16.msra.mxu0 0
        %947 = vmatpush.bf16.msra.mxu0 %v938
        %948 = vmatmul.bf16.gmra.mxu0 %v934
        %v949 = vpop.f32.mrf.mxu0
        %v950 = vadd.f32 0.0, %v949
        %v951 = vpop.f32.mrf.mxu0
        %952 = vdwg.mxu0
        %953 = vrot.lane.b32.xlu0 %v815, 96
        %v954 = vpop.permute.xlu0 %953
        %v956 = vsel %vm794, %v928, 0
        %v959 = vsel %vm936, %v954, 0
        %961 = vmatpush.bf16.msra.mxu0 0
        %962 = vmatpush.bf16.msra.mxu0 0
        %963 = vmatpush.bf16.msra.mxu0 0
        %964 = vmatpush.bf16.msra.mxu0 0
        %965 = vmatpush.bf16.msra.mxu0 0
        %966 = vmatpush.bf16.msra.mxu0 0
        %967 = vmatpush.bf16.msra.mxu0 0
        %968 = vmatpush.bf16.msra.mxu0 %v959
        %969 = vmatmul.bf16.gmra.mxu0 %v956
        %v970 = vpop.f32.mrf.mxu0
        %v971 = vadd.f32 0.0, %v970
        %v972 = vpop.f32.mrf.mxu0
        %973 = vdwg.mxu0
        %974 = vrot.lane.b32.xlu0 %v838, 96
        %v975 = vpop.permute.xlu0 %974
        %v977 = vsel %vm794, %v929, 0
        %v980 = vsel %vm936, %v975, 0
        %982 = vmatpush.bf16.msra.mxu0 0
        %983 = vmatpush.bf16.msra.mxu0 0
        %984 = vmatpush.bf16.msra.mxu0 0
        %985 = vmatpush.bf16.msra.mxu0 0
        %986 = vmatpush.bf16.msra.mxu0 0
        %987 = vmatpush.bf16.msra.mxu0 0
        %988 = vmatpush.bf16.msra.mxu0 0
        %989 = vmatpush.bf16.msra.mxu0 %v980
        %990 = vmatmul.bf16.gmra.mxu0 %v977
        %v991 = vpop.f32.mrf.mxu0
        %v992 = vadd.f32 0.0, %v991
        %v993 = vpop.f32.mrf.mxu0
        %994 = vdwg.mxu0
        %995 = vrot.lane.b32.xlu0 %v861, 96
        %v996 = vpop.permute.xlu0 %995
        %v998 = vsel %vm794, %v930, 0
        %v1001 = vsel %vm936, %v996, 0
        %1003 = vmatpush.bf16.msra.mxu0 0
        %1004 = vmatpush.bf16.msra.mxu0 0
        %1005 = vmatpush.bf16.msra.mxu0 0
        %1006 = vmatpush.bf16.msra.mxu0 0
        %1007 = vmatpush.bf16.msra.mxu0 0
        %1008 = vmatpush.bf16.msra.mxu0 0
        %1009 = vmatpush.bf16.msra.mxu0 0
        %1010 = vmatpush.bf16.msra.mxu0 %v1001
        %1011 = vmatmul.bf16.gmra.mxu0 %v998
        %v1012 = vpop.f32.mrf.mxu0
        %v1013 = vadd.f32 0.0, %v1012
        %v1014 = vpop.f32.mrf.mxu0
        %1015 = vdwg.mxu0
        %v1016 = vpack.c.bf16 %v950, %v950
        %v1017 = vpack.c.bf16 %v971, %v971
        %v1018 = vpack.c.bf16 %v992, %v992
        %v1019 = vpack.c.bf16 %v1013, %v1013
        %v1022 = vunpack.c.l.b16 %v1016
        %v1023 = vunpack.c.l.b16 %v1017
        %v1024 = vpack.c.b16 %v1023, %v1022
        %v1027 = vunpack.c.l.b16 %v1018
        %v1028 = vunpack.c.l.b16 %v1019
        %v1029 = vpack.c.b16 %v1028, %v1027
        %1030 = vrot.lane.b32.xlu0 %v1029, 8
        %v1031 = vpop.permute.xlu0 %1030
        %v1034 = vsel %vm794, %v1024, %v1031
        %v1035 = vld [vmem:[%s608] sm:$0xf]
        %v1036 = vld [vmem:[%s608 + $0x4] sm:$0xf]
        %v1039 = vunpack.c.l.b16 %v1035
        %v1040 = vunpack.c.l.b16 %v1036
        %v1041 = vpack.c.b16 %v1040, %v1039
        %vm1043 = vcmask 130048
        %v1044 = vsel %vm1043, %v1034, 0
        %1046 = vmatpush.bf16.msra.mxu0 0
        %1047 = vmatpush.bf16.msra.mxu0 0
        %1048 = vmatpush.bf16.msra.mxu0 0
        %1049 = vmatpush.bf16.msra.mxu0 0
        %1050 = vmatpush.bf16.msra.mxu0 0
        %1051 = vmatpush.bf16.msra.mxu0 0
        %1052 = vmatpush.bf16.msra.mxu0 0
        %1053 = vmatpush.bf16.msra.mxu0 %v1041
        %1054 = vmatmul.bf16.gmra.mxu0 %v1044
        %v1055 = vpop.f32.mrf.mxu0
        %v1056 = vadd.f32 %v701, %v1055
        %v1057 = vpop.f32.mrf.mxu0
        %v1058 = vadd.f32 %v702, %v1057
        %1059 = vdwg.mxu0
        %v1060 = vld [vmem:[%s611] sm:$0x1]
        %v1061 = vld [vmem:[%s614] sm:$0x1]
        %1062 = vadd.xlane.f32.xlu0 %v1056
        %v1063 = vpop.xlane.xlu0 %1062
        %1064 = vadd.xlane.f32.xlu0 %v1058
        %v1065 = vpop.xlane.xlu0 %1064
        %v1066 = vmul.f32 %v1063, 0.03125
        %v1067 = vmul.f32 %v1065, 0.03125
        %v1068 = vsub.f32 %v1056, %v1066
        %v1069 = vsub.f32 %v1058, %v1067
        %v1070 = vlaneseq
        %v1071 = vand.u32 %v1070, 127
        %vm1072 = vcmp.lt.s32.totalorder %v1071, 32
        %v1073 = vsel %vm1072, 1, 0
        %v1074 = vcvt.s32.f32 %v1073
        %v1075 = vmul.f32 %v1068, %v1074
        %v1076 = vmul.f32 %v1069, %v1074
        %v1077 = vmul.f32 %v1075, %v1075
        %v1078 = vmul.f32 %v1076, %v1076
        %1079 = vadd.xlane.f32.xlu0 %v1077
        %v1080 = vpop.xlane.xlu0 %1079
        %1081 = vadd.xlane.f32.xlu0 %v1078
        %v1082 = vpop.xlane.xlu0 %1081
        %v1083 = vmul.f32 %v1080, 0.03125
        %v1084 = vmul.f32 %v1082, 0.03125
        %v1085 = vadd.f32 %v1083, 1e-06
        %v1086 = vadd.f32 %v1084, 1e-06
        %v1087 = vrsqrt.pop %v1085
        %v1088 = vmul.f32 %v1087, %v1085
        %v1089 = vmul.f32 %v1088, %v1087
        %v1090 = vmul.f32 0.5, %v1089
        %v1091 = vsub.f32 1.5, %v1090
        %v1092 = vmul.f32 %v1087, %v1091
        %vm1093 = vweird.f32 %v1085
        %vm1094 = vweird.f32 %v1087
        %vm1095 = vmor %vm1093, %vm1094
        %v1096 = vsel %vm1095, %v1087, %v1092
        %v1097 = vrsqrt.pop %v1086
        %v1098 = vmul.f32 %v1097, %v1086
        %v1099 = vmul.f32 %v1098, %v1097
        %v1100 = vmul.f32 0.5, %v1099
        %v1101 = vsub.f32 1.5, %v1100
        %v1102 = vmul.f32 %v1097, %v1101
        %vm1103 = vweird.f32 %v1086
        %vm1104 = vweird.f32 %v1097
        %vm1105 = vmor %vm1103, %vm1104
        %v1106 = vsel %vm1105, %v1097, %v1102
        %v1107 = vmul.f32 %v1075, %v1096
        %v1108 = vmul.f32 %v1076, %v1106
        %v1110 = vperm.slane %v1060, 0
        %v1112 = vmul.f32 %v1107, %v1110
        %v1113 = vmul.f32 %v1108, %v1110
        %v1115 = vperm.slane %v1061, 0
        %v1117 = vadd.f32 %v1112, %v1115
        %v1118 = vadd.f32 %v1113, %v1115
        %v1119 = vpack.c.bf16 %v1118, %v1117
        %v1120 = vld [vmem:[%s619] sm:$0xf]
        %v1121 = vld [vmem:[%s619 + $0x4] sm:$0xf]
        %v1122 = vld [vmem:[%s619 + $0x8] sm:$0xf]
        %v1123 = vld [vmem:[%s619 + $0xc] sm:$0xf]
        %v1124 = vld [vmem:[%s619 + $0x10] sm:$0xf]
        %v1125 = vld [vmem:[%s619 + $0x14] sm:$0xf]
        %v1126 = vld [vmem:[%s619 + $0x18] sm:$0xf]
        %v1127 = vld [vmem:[%s619 + $0x1c] sm:$0xf]
        %v1128 = vld [vmem:[%s619 + $0x20] sm:$0xf]
        %v1129 = vld [vmem:[%s619 + $0x24] sm:$0xf]
        %v1130 = vld [vmem:[%s619 + $0x28] sm:$0xf]
        %v1131 = vld [vmem:[%s619 + $0x2c] sm:$0xf]
        %v1132 = vld [vmem:[%s619 + $0x30] sm:$0xf]
        %v1133 = vld [vmem:[%s619 + $0x34] sm:$0xf]
        %v1134 = vld [vmem:[%s619 + $0x38] sm:$0xf]
        %v1135 = vld [vmem:[%s619 + $0x3c] sm:$0xf]
        %v1136 = vld [vmem:[%s622] sm:$0x1]
        %v1138 = vperm.slane %v1136, 0
        %v1156 = vunpack.c.l.b16 %v1120
        %v1157 = vunpack.c.l.b16 %v1121
        %v1158 = vunpack.c.l.b16 %v1122
        %v1159 = vunpack.c.l.b16 %v1123
        %v1160 = vunpack.c.l.b16 %v1124
        %v1161 = vunpack.c.l.b16 %v1125
        %v1162 = vunpack.c.l.b16 %v1126
        %v1163 = vunpack.c.l.b16 %v1127
        %v1164 = vunpack.c.l.b16 %v1128
        %v1165 = vunpack.c.l.b16 %v1129
        %v1166 = vunpack.c.l.b16 %v1130
        %v1167 = vunpack.c.l.b16 %v1131
        %v1168 = vunpack.c.l.b16 %v1132
        %v1169 = vunpack.c.l.b16 %v1133
        %v1170 = vunpack.c.l.b16 %v1134
        %v1171 = vunpack.c.l.b16 %v1135
        %v1172 = vpack.c.b16 %v1157, %v1156
        %v1173 = vpack.c.b16 %v1159, %v1158
        %v1174 = vpack.c.b16 %v1161, %v1160
        %v1175 = vpack.c.b16 %v1163, %v1162
        %v1176 = vpack.c.b16 %v1165, %v1164
        %v1177 = vpack.c.b16 %v1167, %v1166
        %v1178 = vpack.c.b16 %v1169, %v1168
        %v1179 = vpack.c.b16 %v1171, %v1170
        %1188 = vmatpush.bf16.msra.mxu0 %v1179
        %1189 = vmatpush.bf16.msra.mxu0 %v1178
        %1190 = vmatpush.bf16.msra.mxu0 %v1177
        %1191 = vmatpush.bf16.msra.mxu0 %v1176
        %1192 = vmatpush.bf16.msra.mxu0 %v1175
        %1193 = vmatpush.bf16.msra.mxu0 %v1174
        %1194 = vmatpush.bf16.msra.mxu0 %v1173
        %1195 = vmatpush.bf16.msra.mxu0 %v1172
        %1196 = vmatmul.bf16.gmra.mxu0 %v1119
        %v1197 = vpop.f32.mrf.mxu0
        %v1198 = vadd.f32 %v1138, %v1197
        %v1199 = vpop.f32.mrf.mxu0
        %v1200 = vadd.f32 %v1138, %v1199
        %1201 = vdwg.mxu0
        %v1202 = vmax.f32 %v1198, 0.0
        %v1203 = vmax.f32 %v1200, 0.0
        %v1204 = vpack.c.bf16 %v1203, %v1202
        %v1205 = vld [vmem:[%s516] sm:$0xf]
        %v1206 = vld [vmem:[%s516 + $0x4] sm:$0xf]
        %v1207 = vld [vmem:[%s516 + $0x8] sm:$0xf]
        %v1208 = vld [vmem:[%s516 + $0xc] sm:$0xf]
        %v1209 = vld [vmem:[%s516 + $0x10] sm:$0xf]
        %v1210 = vld [vmem:[%s516 + $0x14] sm:$0xf]
        %v1211 = vld [vmem:[%s516 + $0x18] sm:$0xf]
        %v1212 = vld [vmem:[%s516 + $0x1c] sm:$0xf]
        %v1213 = vld [vmem:[%s516 + $0x20] sm:$0xf]
        %v1214 = vld [vmem:[%s516 + $0x24] sm:$0xf]
        %v1215 = vld [vmem:[%s516 + $0x28] sm:$0xf]
        %v1216 = vld [vmem:[%s516 + $0x2c] sm:$0xf]
        %v1217 = vld [vmem:[%s516 + $0x30] sm:$0xf]
        %v1218 = vld [vmem:[%s516 + $0x34] sm:$0xf]
        %v1219 = vld [vmem:[%s516 + $0x38] sm:$0xf]
        %v1220 = vld [vmem:[%s516 + $0x3c] sm:$0xf]
        %v1221 = vld [vmem:[%s625] sm:$0x1]
        %v1223 = vperm.slane %v1221, 0
        %v1241 = vunpack.c.l.b16 %v1205
        %v1242 = vunpack.c.l.b16 %v1206
        %v1243 = vunpack.c.l.b16 %v1207
        %v1244 = vunpack.c.l.b16 %v1208
        %v1245 = vunpack.c.l.b16 %v1209
        %v1246 = vunpack.c.l.b16 %v1210
        %v1247 = vunpack.c.l.b16 %v1211
        %v1248 = vunpack.c.l.b16 %v1212
        %v1249 = vunpack.c.l.b16 %v1213
        %v1250 = vunpack.c.l.b16 %v1214
        %v1251 = vunpack.c.l.b16 %v1215
        %v1252 = vunpack.c.l.b16 %v1216
        %v1253 = vunpack.c.l.b16 %v1217
        %v1254 = vunpack.c.l.b16 %v1218
        %v1255 = vunpack.c.l.b16 %v1219
        %v1256 = vunpack.c.l.b16 %v1220
        %v1257 = vpack.c.b16 %v1242, %v1241
        %v1258 = vpack.c.b16 %v1244, %v1243
        %v1259 = vpack.c.b16 %v1246, %v1245
        %v1260 = vpack.c.b16 %v1248, %v1247
        %v1261 = vpack.c.b16 %v1250, %v1249
        %v1262 = vpack.c.b16 %v1252, %v1251
        %v1263 = vpack.c.b16 %v1254, %v1253
        %v1264 = vpack.c.b16 %v1256, %v1255
        %1273 = vmatpush.bf16.msra.mxu0 %v1264
        %1274 = vmatpush.bf16.msra.mxu0 %v1263
        %1275 = vmatpush.bf16.msra.mxu0 %v1262
        %1276 = vmatpush.bf16.msra.mxu0 %v1261
        %1277 = vmatpush.bf16.msra.mxu0 %v1260
        %1278 = vmatpush.bf16.msra.mxu0 %v1259
        %1279 = vmatpush.bf16.msra.mxu0 %v1258
        %1280 = vmatpush.bf16.msra.mxu0 %v1257
        %1281 = vmatmul.bf16.gmra.mxu0 %v1204
        %v1282 = vpop.f32.mrf.mxu0
        %v1283 = vadd.f32 %v1223, %v1282
        %v1284 = vpop.f32.mrf.mxu0
        %v1285 = vadd.f32 %v1223, %v1284
        %1286 = vdwg.mxu0
        %v1287 = vadd.f32 %v1283, %v1117
        %v1288 = vadd.f32 %v1285, %v1118
        %v1289 = vld [vmem:[%s628] sm:$0x1]
        %v1290 = vld [vmem:[%s631] sm:$0x1]
        %1291 = vadd.xlane.f32.xlu0 %v1287
        %v1292 = vpop.xlane.xlu0 %1291
        %1293 = vadd.xlane.f32.xlu0 %v1288
        %v1294 = vpop.xlane.xlu0 %1293
        %v1295 = vmul.f32 %v1292, 0.03125
        %v1296 = vmul.f32 %v1294, 0.03125
        %v1297 = vsub.f32 %v1287, %v1295
        %v1298 = vsub.f32 %v1288, %v1296
        %v1299 = vmul.f32 %v1297, %v1074
        %v1300 = vmul.f32 %v1298, %v1074
        %v1301 = vmul.f32 %v1299, %v1299
        %v1302 = vmul.f32 %v1300, %v1300
        %1303 = vadd.xlane.f32.xlu0 %v1301
        %v1304 = vpop.xlane.xlu0 %1303
        %1305 = vadd.xlane.f32.xlu0 %v1302
        %v1306 = vpop.xlane.xlu0 %1305
        %v1307 = vmul.f32 %v1304, 0.03125
        %v1308 = vmul.f32 %v1306, 0.03125
        %v1309 = vadd.f32 %v1307, 1e-06
        %v1310 = vadd.f32 %v1308, 1e-06
        %v1311 = vrsqrt.pop %v1309
        %v1312 = vmul.f32 %v1311, %v1309
        %v1313 = vmul.f32 %v1312, %v1311
        %v1314 = vmul.f32 0.5, %v1313
        %v1315 = vsub.f32 1.5, %v1314
        %v1316 = vmul.f32 %v1311, %v1315
        %vm1317 = vweird.f32 %v1309
        %vm1318 = vweird.f32 %v1311
        %vm1319 = vmor %vm1317, %vm1318
        %v1320 = vsel %vm1319, %v1311, %v1316
        %v1321 = vrsqrt.pop %v1310
        %v1322 = vmul.f32 %v1321, %v1310
        %v1323 = vmul.f32 %v1322, %v1321
        %v1324 = vmul.f32 0.5, %v1323
        %v1325 = vsub.f32 1.5, %v1324
        %v1326 = vmul.f32 %v1321, %v1325
        %vm1327 = vweird.f32 %v1310
        %vm1328 = vweird.f32 %v1321
        %vm1329 = vmor %vm1327, %vm1328
        %v1330 = vsel %vm1329, %v1321, %v1326
        %v1331 = vmul.f32 %v1299, %v1320
        %v1332 = vmul.f32 %v1300, %v1330
        %v1334 = vperm.slane %v1289, 0
        %v1336 = vmul.f32 %v1331, %v1334
        %v1337 = vmul.f32 %v1332, %v1334
        %v1339 = vperm.slane %v1290, 0
        %v1341 = vadd.f32 %v1336, %v1339
        %v1342 = vadd.f32 %v1337, %v1339
        %1343 = vst [vmem:[#allocation5] sm:$0xff] %v1341
        %1344 = vst [vmem:[#allocation5 + $0x8] sm:$0xff] %v1342
        // Predicated region
        $region81: #{tpu_custom_call.1} parent=71 // pred_check
          %p1345 = pneg %p386
        $region82: #{tpu_custom_call.1} parent=71 // pred_check_branch
          %1347 = sbr.rel (%p1345) target = $region84
        $region83: #{tpu_custom_call.1} parent=71 // pred_region
          %s1348 = smul.u32 2, %s32
          %1350 = vsyncadd [#allocation4], 0
          %s1351 = smul.addr %s1348, 8
          %s1352 = scalar_lea.hbm %s13, %s1351
          %s1353 = sshll.u32 [#allocation5], 4
          %s1354 = int_to_ptr.vmem [resolvable:$true] %s1353
          %s1355 = sshll.u32 %s1352, 4
          %s1356 = int_to_ptr.hbm [resolvable:$true] %s1355
          %1361 = dma.vmem_to_hbm [thread:$0]  %s1354, 256, %s1356, [#allocation4], 128, 128, 8
        $region84: #{tpu_custom_call.1} parent=71 // pred_fallthru
          _
        // Predicated region
        $region85: #{tpu_custom_call.1} parent=71 // pred_check
          %p1362 = pneg %p386
        $region86: #{tpu_custom_call.1} parent=71 // pred_check_branch
          %1364 = sbr.rel (%p1362) target = $region88
        $region87: #{tpu_custom_call.1} parent=71 // pred_region
          %1366 = dma.done [#allocation4], 256
        $region88: #{tpu_custom_call.1} parent=71 // pred_fallthru
          _
      $region72: #{tpu_custom_call.1} parent=5 // pred_fallthru
        _
      %p1367 = scmp.le.s32.totalorder 2, %s23
      // Predicated region
      $region89: #{tpu_custom_call.1} parent=5 // pred_check
        %p1368 = pneg %p1367
      $region90: #{tpu_custom_call.1} parent=5 // pred_check_branch
        %1370 = sbr.rel (%p1368) target = $region92
      $region91: #{tpu_custom_call.1} parent=5 // pred_region
        %s1371 = ssub.s32 %s23, 2
      $region92: #{tpu_custom_call.1} parent=5 // pred_fallthru
        _
    $region6: #{tpu_custom_call.1} parent=1 // loop_footer
      %s27 = sadd.s32 1, %s23
    $region7: #{tpu_custom_call.1} parent=1 // loop_footer_branch
      %22 = sbr.rel target = $region3
    $region8: #{tpu_custom_call.1} parent=1 // loop_exit
      _
    %1372 = vsyncpa [#allocation3], 1
    %s1373 = scalar_lea.sflag [#allocation3], 1
    %1374 = vsyncpa %s1373, 1
    %1375 = vsyncpa [#allocation4], 1
    %s1376 = scalar_lea.sflag [#allocation4], 1
    %1377 = vsyncpa %s1376, 1

</llo_original>
